<compile_context>
chip_gen: v7x
topology: tpu7x:2x2x1
jax: 0.10.0
libtpu: 0.0.40
codegen_flags: <defaults>
</compile_context>

<pallas_src>
import jax
import jax.numpy as jnp
import numpy as np
from jax.experimental import pallas as pl
from jax.experimental.pallas import tpu as pltpu


# ----------------------------------------------------------------------------
# Kernel
# ----------------------------------------------------------------------------
def _cross_task_attn_kernel(x_ref, xq_ref, wq_ref, wkv_ref, bq_ref, bkv_ref,
                            o_ref, kv_scr):
    # x_ref:   [T, H]          bf16  all task features (resident every step)
    # xq_ref:  [1, TB, H]      bf16  the TB query rows of this block
    # wq_ref:  [1, H, TB*H]    bf16  per-block fused Wq (task t at cols t*H:(t+1)*H)
    # wkv_ref: [1, H, TB*2H]   bf16  per-block fused Wk|Wv (task t at cols t*2H:(t+1)*2H)
    # bq_ref:  [1, 1, TB*H]    f32
    # bkv_ref: [1, 1, TB*2H]   f32
    # o_ref:   [1, TB, H]      f32
    # kv_scr:  [T, TB*2H]      f32   VMEM scratch for the fused K|V projection
    T, H = x_ref.shape
    TB = o_ref.shape[1]
    scale = 1.0 / (float(H) ** 0.5)

    x_all = x_ref[...]          # [T, H]      bf16
    x_q = xq_ref[0]             # [TB, H]     bf16
    w_q = wq_ref[0]             # [H, TB*H]   bf16
    w_kv = wkv_ref[0]           # [H, TB*2H]  bf16
    b_q = bq_ref[0]             # [1, TB*H]   f32
    b_kv = bkv_ref[0]           # [1, TB*2H]  f32

    # One MXU matmul for all K|V of this block's TB tasks (f32 accumulation),
    # parked in VMEM scratch so the unrolled loop reloads cheap 128-lane slices
    # instead of pinning the whole [T, TB*2H] f32 value in vregs.
    kv_scr[...] = jnp.dot(x_all, w_kv, preferred_element_type=jnp.float32) + b_kv

    # Small MXU matmul for the TB queries (only the rows actually used).
    # Task t's query is the diagonal block qf[t, t*H:(t+1)*H].
    qf = jnp.dot(x_q, w_q, preferred_element_type=jnp.float32) + b_q   # [TB, TB*H]

    for t in range(TB):                                  # static unroll, TB small
        q = qf[t:t + 1, t * H:(t + 1) * H]               # [1, H]
        k = kv_scr[:, t * 2 * H:t * 2 * H + H]           # [T, H]  (lane-aligned slice)
        v = kv_scr[:, t * 2 * H + H:(t + 1) * 2 * H]     # [T, H]

        # Scores on VPU (multiply) + XLU (lane reduce): no M=1 MXU matmul.
        s = jnp.sum(q * k, axis=-1, keepdims=True) * scale           # [T, 1] f32
        s = s - jnp.max(s, axis=0, keepdims=True)                    # stable softmax
        e = jnp.exp(s)                                               # EUP
        attn = e * pl.reciprocal(jnp.sum(e, axis=0, keepdims=True), approx=True)  # [T, 1]

        # attn @ V as VPU multiply + XLU sublane reduce.
        row = jnp.sum(attn * v, axis=0, keepdims=True)               # [1, H] f32

        # Direct lane-dense store of this task's output row (no concatenate).
        o_ref[0:1, t:t + 1, :] = row[None].astype(o_ref.dtype)


# ----------------------------------------------------------------------------
# Host-side helpers
# ----------------------------------------------------------------------------
def _pick_block_tasks(num_tasks, hidden):
    """Tasks per grid step, per TPU generation, with a VMEM-aware cap."""
    try:
        kind = jax.devices()[0].device_kind.lower()
    except Exception:
        kind = ""
    # v6e (single TC, fast HBM): fewest grid steps wins -> grid=1.
    # v7x (2 TCs): keep grid >= 2 so both cores get a block.
    # v5e (slow HBM): keep grid = 2 so BlockSpec pipelining hides weight DMA.
    min_grid = 1 if "v6" in kind else 2

    vmem_budget = 24 * 1024 * 1024   # conservative vs 32 MiB default scoped VMEM

    def fits(tb):
        w_bytes = 2 * (tb * 3 * hidden) * hidden * 2          # double-buffered bf16 q+kv slabs
        kv_scratch = num_tasks * tb * 2 * hidden * 4          # f32 scratch
        misc = num_tasks * hidden * 4 + 8 * tb * hidden * 4   # x, biases, out, qf
        return w_bytes + kv_scratch + misc <= vmem_budget

    divisors = [tb for tb in range(num_tasks, 0, -1) if num_tasks % tb == 0]
    for tb in divisors:
        if num_tasks // tb >= min_grid and fits(tb):
            return tb
    for tb in divisors:           # relax the grid preference before giving up
        if fits(tb):
            return tb
    return 1


def pack_cross_task_attention_params(wq, bq, wk, bk, wv, bv, block_tasks):
    """One-time weight repack (call at init, NOT per forward).

    wq/wk/wv: [T, H, H] in (in, out) layout; bq/bk/bv: [T, H].
    Returns (w_q, w_kv, b_q, b_kv) laid out per grid block.
    """
    T, H, _ = wq.shape
    TB = block_tasks
    assert T % TB == 0
    G = T // TB

    # K|V fused per task, TB tasks side by side along lanes: [G, H, TB*2H] bf16.
    w_kv = jnp.concatenate([wk, wv], axis=-1)                              # [T, H, 2H]
    w_kv = w_kv.reshape(G, TB, H, 2 * H).transpose(0, 2, 1, 3)             # [G, H, TB, 2H]
    w_kv = w_kv.reshape(G, H, TB * 2 * H).astype(jnp.bfloat16)

    # Q fused per block: [G, H, TB*H] bf16 (task t's Wq at cols t*H:(t+1)*H).
    w_q = wq.reshape(G, TB, H, H).transpose(0, 2, 1, 3)                    # [G, H, TB, H]
    w_q = w_q.reshape(G, H, TB * H).astype(jnp.bfloat16)

    b_kv = jnp.concatenate([bk, bv], axis=-1).reshape(G, 1, TB * 2 * H).astype(jnp.float32)
    b_q = bq.reshape(G, 1, TB * H).astype(jnp.float32)
    return w_q, w_kv, b_q, b_kv


def cross_task_attention(x, packed_params):
    """x: [T, H]; packed_params from pack_cross_task_attention_params()."""
    T, H = x.shape
    w_q, w_kv, b_q, b_kv = packed_params
    G = w_q.shape[0]
    TB = w_q.shape[2] // H
    assert G * TB == T

    x_bf16 = x.astype(jnp.bfloat16)
    x_blocks = x_bf16.reshape(G, TB, H)       # layout-identical view of the query rows

    out = pl.pallas_call(
        _cross_task_attn_kernel,
        out_shape=jax.ShapeDtypeStruct((G, TB, H), jnp.float32),
        grid_spec=pltpu.PrefetchScalarGridSpec(
            num_scalar_prefetch=0,
            grid=(G,),
            in_specs=[
                pl.BlockSpec((T, H), lambda i: (0, 0)),                   # x (whole, every step)
                pl.BlockSpec((1, TB, H), lambda i: (i, 0, 0)),            # query rows of block i
                pl.BlockSpec((1, H, TB * H), lambda i: (i, 0, 0)),        # fused Wq of block i
                pl.BlockSpec((1, H, TB * 2 * H), lambda i: (i, 0, 0)),    # fused Wk|Wv of block i
                pl.BlockSpec((1, 1, TB * H), lambda i: (i, 0, 0)),        # fused bq
                pl.BlockSpec((1, 1, TB * 2 * H), lambda i: (i, 0, 0)),    # fused bk|bv
            ],
            out_specs=pl.BlockSpec((1, TB, H), lambda i: (i, 0, 0)),
            scratch_shapes=[pltpu.VMEM((T, TB * 2 * H), jnp.float32)],
        ),
        compiler_params=pltpu.CompilerParams(
            dimension_semantics=("parallel",),
        ),
    )(x_bf16, x_blocks, w_q, w_kv, b_q, b_kv)
    return out.reshape(T, H).astype(x.dtype)


def cross_task_attention_reference(x, wq, bq, wk, bk, wv, bv):
    """Pure-JAX f32 reference mirroring the PyTorch forward exactly."""
    T, H = x.shape
    outs = []
    for i in range(T):
        q = x[i:i + 1] @ wq[i] + bq[i]            # [1, H]
        k = x @ wk[i] + bk[i]                     # [T, H]
        v = x @ wv[i] + bv[i]                     # [T, H]
        s = (q @ k.T) / (H ** 0.5)                # [1, T]
        w = jax.nn.softmax(s, axis=-1)
        outs.append((w @ v)[0])                   # [H]
    return jnp.stack(outs)                        # [T, H]


if __name__ == "__main__":
    num_tasks = 8
    hidden = 128

    key = jax.random.PRNGKey(0)
    keys = jax.random.split(key, 7)
    bound = 1.0 / (hidden ** 0.5)   # PyTorch nn.Linear default init range

    # Weights stored as (in, out) = transpose of PyTorch's [out, in] layout.
    x = jax.random.normal(keys[0], (num_tasks, hidden), dtype=jnp.float32)
    wq = jax.random.uniform(keys[1], (num_tasks, hidden, hidden), jnp.float32, -bound, bound)
    bq = jax.random.uniform(keys[2], (num_tasks, hidden), jnp.float32, -bound, bound)
    wk = jax.random.uniform(keys[3], (num_tasks, hidden, hidden), jnp.float32, -bound, bound)
    bk = jax.random.uniform(keys[4], (num_tasks, hidden), jnp.float32, -bound, bound)
    wv = jax.random.uniform(keys[5], (num_tasks, hidden, hidden), jnp.float32, -bound, bound)
    bv = jax.random.uniform(keys[6], (num_tasks, hidden), jnp.float32, -bound, bound)

    # One-time init-path packing (hoisted out of the per-forward path).
    TB = _pick_block_tasks(num_tasks, hidden)
    packed = pack_cross_task_attention_params(wq, bq, wk, bk, wv, bv, TB)
    packed = jax.tree_util.tree_map(jax.block_until_ready, packed)

    out = cross_task_attention(x, packed)
    out = jax.block_until_ready(out)

    ref = cross_task_attention_reference(x, wq, bq, wk, bk, wv, bv)
    # Tolerance: projections run with bf16 inputs (f32 accumulation / softmax,
    # approximate reciprocal in the softmax denominator) -> ~1e-2 level.
    np.testing.assert_allclose(np.asarray(out), np.asarray(ref), rtol=3e-2, atol=3e-2)

    print("KERNEL_OK")
</pallas_src>

<mosaic_0001>
module attributes {stable_mosaic.version = 11 : i64} {
  func.func @_cross_task_attn_kernel(%arg0: i32, %arg1: memref<8x128xbf16, #tpu.memory_space<vmem>>, %arg2: memref<1x4x128xbf16, #tpu.memory_space<vmem>>, %arg3: memref<1x128x512xbf16, #tpu.memory_space<vmem>>, %arg4: memref<1x128x1024xbf16, #tpu.memory_space<vmem>>, %arg5: memref<1x1x512xf32, #tpu.memory_space<vmem>>, %arg6: memref<1x1x1024xf32, #tpu.memory_space<vmem>>, %arg7: memref<1x4x128xf32, #tpu.memory_space<vmem>>, %arg8: memref<8x1024xf32, #tpu.memory_space<vmem>>) attributes {dimension_semantics = [#tpu.dimension_semantics<parallel>], iteration_bounds = array<i64: 2>, scalar_prefetch = 0 : i64, scratch_operands = 1 : i64, tpu.core_type = #tpu.core_type<tc>, window_params = [{pipeline_mode = #tpu.pipeline_mode<synchronous>, transform_indices = @transform_0, window_bounds = array<i64: 8, 128>}, {transform_indices = @transform_1, window_bounds = array<i64: 1, 4, 128>}, {transform_indices = @transform_2, window_bounds = array<i64: 1, 128, 512>}, {transform_indices = @transform_3, window_bounds = array<i64: 1, 128, 1024>}, {transform_indices = @transform_4, window_bounds = array<i64: 1, 1, 512>}, {transform_indices = @transform_5, window_bounds = array<i64: 1, 1, 1024>}, {transform_indices = @transform_6, window_bounds = array<i64: 1, 4, 128>}]} {
    %c0 = arith.constant 0 : index
    %c0_0 = arith.constant 0 : index
    %0 = vector.load %arg1[%c0, %c0_0] : memref<8x128xbf16, #tpu.memory_space<vmem>>, vector<8x128xbf16>
    %c0_1 = arith.constant 0 : index
    %c0_2 = arith.constant 0 : index
    %c0_3 = arith.constant 0 : index
    %1 = vector.load %arg2[%c0_1, %c0_2, %c0_3] : memref<1x4x128xbf16, #tpu.memory_space<vmem>>, vector<1x4x128xbf16>
    %2 = vector.shape_cast %1 : vector<1x4x128xbf16> to vector<4x128xbf16>
    %c0_4 = arith.constant 0 : index
    %c0_5 = arith.constant 0 : index
    %c0_6 = arith.constant 0 : index
    %3 = vector.load %arg3[%c0_4, %c0_5, %c0_6] : memref<1x128x512xbf16, #tpu.memory_space<vmem>>, vector<1x128x512xbf16>
    %4 = vector.shape_cast %3 : vector<1x128x512xbf16> to vector<128x512xbf16>
    %c0_7 = arith.constant 0 : index
    %c0_8 = arith.constant 0 : index
    %c0_9 = arith.constant 0 : index
    %5 = vector.load %arg4[%c0_7, %c0_8, %c0_9] : memref<1x128x1024xbf16, #tpu.memory_space<vmem>>, vector<1x128x1024xbf16>
    %6 = vector.shape_cast %5 : vector<1x128x1024xbf16> to vector<128x1024xbf16>
    %c0_10 = arith.constant 0 : index
    %c0_11 = arith.constant 0 : index
    %c0_12 = arith.constant 0 : index
    %7 = vector.load %arg5[%c0_10, %c0_11, %c0_12] : memref<1x1x512xf32, #tpu.memory_space<vmem>>, vector<1x1x512xf32>
    %8 = vector.shape_cast %7 : vector<1x1x512xf32> to vector<1x512xf32>
    %c0_13 = arith.constant 0 : index
    %c0_14 = arith.constant 0 : index
    %c0_15 = arith.constant 0 : index
    %9 = vector.load %arg6[%c0_13, %c0_14, %c0_15] : memref<1x1x1024xf32, #tpu.memory_space<vmem>>, vector<1x1x1024xf32>
    %10 = vector.shape_cast %9 : vector<1x1x1024xf32> to vector<1x1024xf32>
    %cst = arith.constant dense<0.000000e+00> : vector<8x1024xf32>
    %11 = tpu.matmul %0, %6, %cst {dimension_numbers = #tpu.dot_dimension_numbers<[1], [0], [0], [1], [0, 0, 1, 1], [], []>} : vector<8x128xbf16>, vector<128x1024xbf16>, vector<8x1024xf32> -> vector<8x1024xf32>
    %12 = vector.broadcast %10 : vector<1x1024xf32> to vector<8x1024xf32>
    %13 = arith.addf %11, %12 : vector<8x1024xf32>
    %c0_16 = arith.constant 0 : index
    %c0_17 = arith.constant 0 : index
    %14 = vector.load %arg8[%c0_16, %c0_17] : memref<8x1024xf32, #tpu.memory_space<vmem>>, vector<8x1024xf32>
    tpu.vector_store %arg8[%c0_16, %c0_17], %13 {strides = array<i32>} : memref<8x1024xf32, #tpu.memory_space<vmem>>, vector<8x1024xf32>,
    %cst_18 = arith.constant dense<0.000000e+00> : vector<4x512xf32>
    %15 = tpu.matmul %2, %4, %cst_18 {dimension_numbers = #tpu.dot_dimension_numbers<[1], [0], [0], [1], [0, 0, 1, 1], [], []>} : vector<4x128xbf16>, vector<128x512xbf16>, vector<4x512xf32> -> vector<4x512xf32>
    %16 = vector.broadcast %8 : vector<1x512xf32> to vector<4x512xf32>
    %17 = arith.addf %15, %16 : vector<4x512xf32>
    %18 = vector.extract_strided_slice %17 {offsets = [0, 0], sizes = [1, 128], strides = [1, 1]} : vector<4x512xf32> to vector<1x128xf32>
    %c0_19 = arith.constant 0 : index
    %c0_20 = arith.constant 0 : index
    %19 = vector.load %arg8[%c0_19, %c0_20] : memref<8x1024xf32, #tpu.memory_space<vmem>>, vector<8x128xf32>
    %c0_21 = arith.constant 0 : index
    %c128 = arith.constant 128 : index
    %20 = vector.load %arg8[%c0_21, %c128] : memref<8x1024xf32, #tpu.memory_space<vmem>>, vector<8x128xf32>
    %21 = vector.broadcast %18 : vector<1x128xf32> to vector<8x128xf32>
    %22 = arith.mulf %21, %19 : vector<8x128xf32>
    %cst_22 = arith.constant dense<0.000000e+00> : vector<8xf32>
    %23 = vector.multi_reduction <add>, %22, %cst_22 [1] : vector<8x128xf32> to vector<8xf32>
    %24 = vector.shape_cast %23 : vector<8xf32> to vector<8x1xf32>
    %cst_23 = arith.constant 0.0883883461 : f32
    %25 = vector.broadcast %cst_23 : f32 to vector<8x1xf32>
    %26 = arith.mulf %24, %25 : vector<8x1xf32>
    %cst_24 = arith.constant dense<0xFF800000> : vector<1xf32>
    %27 = vector.multi_reduction <maximumf>, %26, %cst_24 [0] : vector<8x1xf32> to vector<1xf32>
    %28 = vector.shape_cast %27 : vector<1xf32> to vector<1x1xf32>
    %29 = vector.broadcast %28 : vector<1x1xf32> to vector<8x1xf32>
    %30 = arith.subf %26, %29 : vector<8x1xf32>
    %31 = math.exp %30 : vector<8x1xf32>
    %cst_25 = arith.constant dense<0.000000e+00> : vector<1xf32>
    %32 = vector.multi_reduction <add>, %31, %cst_25 [0] : vector<8x1xf32> to vector<1xf32>
    %33 = vector.shape_cast %32 : vector<1xf32> to vector<1x1xf32>
    %34 = tpu.reciprocal %33 {approx = true} : vector<1x1xf32> -> vector<1x1xf32>
    %35 = vector.broadcast %34 : vector<1x1xf32> to vector<8x1xf32>
    %36 = arith.mulf %31, %35 : vector<8x1xf32>
    %37 = vector.broadcast %36 : vector<8x1xf32> to vector<8x128xf32>
    %38 = arith.mulf %37, %20 : vector<8x128xf32>
    %cst_26 = arith.constant dense<0.000000e+00> : vector<128xf32>
    %39 = vector.multi_reduction <add>, %38, %cst_26 [0] : vector<8x128xf32> to vector<128xf32>
    %40 = vector.shape_cast %39 : vector<128xf32> to vector<1x128xf32>
    %41 = vector.shape_cast %40 : vector<1x128xf32> to vector<1x1x128xf32>
    %c0_27 = arith.constant 0 : index
    %c0_28 = arith.constant 0 : index
    %c0_29 = arith.constant 0 : index
    %42 = vector.load %arg7[%c0_27, %c0_28, %c0_29] : memref<1x4x128xf32, #tpu.memory_space<vmem>>, vector<1x1x128xf32>
    tpu.vector_store %arg7[%c0_27, %c0_28, %c0_29], %41 {strides = array<i32>} : memref<1x4x128xf32, #tpu.memory_space<vmem>>, vector<1x1x128xf32>,
    %43 = vector.extract_strided_slice %17 {offsets = [1, 128], sizes = [1, 128], strides = [1, 1]} : vector<4x512xf32> to vector<1x128xf32>
    %c0_30 = arith.constant 0 : index
    %c256 = arith.constant 256 : index
    %44 = vector.load %arg8[%c0_30, %c256] : memref<8x1024xf32, #tpu.memory_space<vmem>>, vector<8x128xf32>
    %c0_31 = arith.constant 0 : index
    %c384 = arith.constant 384 : index
    %45 = vector.load %arg8[%c0_31, %c384] : memref<8x1024xf32, #tpu.memory_space<vmem>>, vector<8x128xf32>
    %46 = vector.broadcast %43 : vector<1x128xf32> to vector<8x128xf32>
    %47 = arith.mulf %46, %44 : vector<8x128xf32>
    %cst_32 = arith.constant dense<0.000000e+00> : vector<8xf32>
    %48 = vector.multi_reduction <add>, %47, %cst_32 [1] : vector<8x128xf32> to vector<8xf32>
    %49 = vector.shape_cast %48 : vector<8xf32> to vector<8x1xf32>
    %cst_33 = arith.constant 0.0883883461 : f32
    %50 = vector.broadcast %cst_33 : f32 to vector<8x1xf32>
    %51 = arith.mulf %49, %50 : vector<8x1xf32>
    %cst_34 = arith.constant dense<0xFF800000> : vector<1xf32>
    %52 = vector.multi_reduction <maximumf>, %51, %cst_34 [0] : vector<8x1xf32> to vector<1xf32>
    %53 = vector.shape_cast %52 : vector<1xf32> to vector<1x1xf32>
    %54 = vector.broadcast %53 : vector<1x1xf32> to vector<8x1xf32>
    %55 = arith.subf %51, %54 : vector<8x1xf32>
    %56 = math.exp %55 : vector<8x1xf32>
    %cst_35 = arith.constant dense<0.000000e+00> : vector<1xf32>
    %57 = vector.multi_reduction <add>, %56, %cst_35 [0] : vector<8x1xf32> to vector<1xf32>
    %58 = vector.shape_cast %57 : vector<1xf32> to vector<1x1xf32>
    %59 = tpu.reciprocal %58 {approx = true} : vector<1x1xf32> -> vector<1x1xf32>
    %60 = vector.broadcast %59 : vector<1x1xf32> to vector<8x1xf32>
    %61 = arith.mulf %56, %60 : vector<8x1xf32>
    %62 = vector.broadcast %61 : vector<8x1xf32> to vector<8x128xf32>
    %63 = arith.mulf %62, %45 : vector<8x128xf32>
    %cst_36 = arith.constant dense<0.000000e+00> : vector<128xf32>
    %64 = vector.multi_reduction <add>, %63, %cst_36 [0] : vector<8x128xf32> to vector<128xf32>
    %65 = vector.shape_cast %64 : vector<128xf32> to vector<1x128xf32>
    %66 = vector.shape_cast %65 : vector<1x128xf32> to vector<1x1x128xf32>
    %c0_37 = arith.constant 0 : index
    %c1 = arith.constant 1 : index
    %c0_38 = arith.constant 0 : index
    %67 = vector.load %arg7[%c0_37, %c1, %c0_38] : memref<1x4x128xf32, #tpu.memory_space<vmem>>, vector<1x1x128xf32>
    tpu.vector_store %arg7[%c0_37, %c1, %c0_38], %66 {strides = array<i32>} : memref<1x4x128xf32, #tpu.memory_space<vmem>>, vector<1x1x128xf32>,
    %68 = vector.extract_strided_slice %17 {offsets = [2, 256], sizes = [1, 128], strides = [1, 1]} : vector<4x512xf32> to vector<1x128xf32>
    %c0_39 = arith.constant 0 : index
    %c512 = arith.constant 512 : index
    %69 = vector.load %arg8[%c0_39, %c512] : memref<8x1024xf32, #tpu.memory_space<vmem>>, vector<8x128xf32>
    %c0_40 = arith.constant 0 : index
    %c640 = arith.constant 640 : index
    %70 = vector.load %arg8[%c0_40, %c640] : memref<8x1024xf32, #tpu.memory_space<vmem>>, vector<8x128xf32>
    %71 = vector.broadcast %68 : vector<1x128xf32> to vector<8x128xf32>
    %72 = arith.mulf %71, %69 : vector<8x128xf32>
    %cst_41 = arith.constant dense<0.000000e+00> : vector<8xf32>
    %73 = vector.multi_reduction <add>, %72, %cst_41 [1] : vector<8x128xf32> to vector<8xf32>
    %74 = vector.shape_cast %73 : vector<8xf32> to vector<8x1xf32>
    %cst_42 = arith.constant 0.0883883461 : f32
    %75 = vector.broadcast %cst_42 : f32 to vector<8x1xf32>
    %76 = arith.mulf %74, %75 : vector<8x1xf32>
    %cst_43 = arith.constant dense<0xFF800000> : vector<1xf32>
    %77 = vector.multi_reduction <maximumf>, %76, %cst_43 [0] : vector<8x1xf32> to vector<1xf32>
    %78 = vector.shape_cast %77 : vector<1xf32> to vector<1x1xf32>
    %79 = vector.broadcast %78 : vector<1x1xf32> to vector<8x1xf32>
    %80 = arith.subf %76, %79 : vector<8x1xf32>
    %81 = math.exp %80 : vector<8x1xf32>
    %cst_44 = arith.constant dense<0.000000e+00> : vector<1xf32>
    %82 = vector.multi_reduction <add>, %81, %cst_44 [0] : vector<8x1xf32> to vector<1xf32>
    %83 = vector.shape_cast %82 : vector<1xf32> to vector<1x1xf32>
    %84 = tpu.reciprocal %83 {approx = true} : vector<1x1xf32> -> vector<1x1xf32>
    %85 = vector.broadcast %84 : vector<1x1xf32> to vector<8x1xf32>
    %86 = arith.mulf %81, %85 : vector<8x1xf32>
    %87 = vector.broadcast %86 : vector<8x1xf32> to vector<8x128xf32>
    %88 = arith.mulf %87, %70 : vector<8x128xf32>
    %cst_45 = arith.constant dense<0.000000e+00> : vector<128xf32>
    %89 = vector.multi_reduction <add>, %88, %cst_45 [0] : vector<8x128xf32> to vector<128xf32>
    %90 = vector.shape_cast %89 : vector<128xf32> to vector<1x128xf32>
    %91 = vector.shape_cast %90 : vector<1x128xf32> to vector<1x1x128xf32>
    %c0_46 = arith.constant 0 : index
    %c2 = arith.constant 2 : index
    %c0_47 = arith.constant 0 : index
    %92 = vector.load %arg7[%c0_46, %c2, %c0_47] : memref<1x4x128xf32, #tpu.memory_space<vmem>>, vector<1x1x128xf32>
    tpu.vector_store %arg7[%c0_46, %c2, %c0_47], %91 {strides = array<i32>} : memref<1x4x128xf32, #tpu.memory_space<vmem>>, vector<1x1x128xf32>,
    %93 = vector.extract_strided_slice %17 {offsets = [3, 384], sizes = [1, 128], strides = [1, 1]} : vector<4x512xf32> to vector<1x128xf32>
    %c0_48 = arith.constant 0 : index
    %c768 = arith.constant 768 : index
    %94 = vector.load %arg8[%c0_48, %c768] : memref<8x1024xf32, #tpu.memory_space<vmem>>, vector<8x128xf32>
    %c0_49 = arith.constant 0 : index
    %c896 = arith.constant 896 : index
    %95 = vector.load %arg8[%c0_49, %c896] : memref<8x1024xf32, #tpu.memory_space<vmem>>, vector<8x128xf32>
    %96 = vector.broadcast %93 : vector<1x128xf32> to vector<8x128xf32>
    %97 = arith.mulf %96, %94 : vector<8x128xf32>
    %cst_50 = arith.constant dense<0.000000e+00> : vector<8xf32>
    %98 = vector.multi_reduction <add>, %97, %cst_50 [1] : vector<8x128xf32> to vector<8xf32>
    %99 = vector.shape_cast %98 : vector<8xf32> to vector<8x1xf32>
    %cst_51 = arith.constant 0.0883883461 : f32
    %100 = vector.broadcast %cst_51 : f32 to vector<8x1xf32>
    %101 = arith.mulf %99, %100 : vector<8x1xf32>
    %cst_52 = arith.constant dense<0xFF800000> : vector<1xf32>
    %102 = vector.multi_reduction <maximumf>, %101, %cst_52 [0] : vector<8x1xf32> to vector<1xf32>
    %103 = vector.shape_cast %102 : vector<1xf32> to vector<1x1xf32>
    %104 = vector.broadcast %103 : vector<1x1xf32> to vector<8x1xf32>
    %105 = arith.subf %101, %104 : vector<8x1xf32>
    %106 = math.exp %105 : vector<8x1xf32>
    %cst_53 = arith.constant dense<0.000000e+00> : vector<1xf32>
    %107 = vector.multi_reduction <add>, %106, %cst_53 [0] : vector<8x1xf32> to vector<1xf32>
    %108 = vector.shape_cast %107 : vector<1xf32> to vector<1x1xf32>
    %109 = tpu.reciprocal %108 {approx = true} : vector<1x1xf32> -> vector<1x1xf32>
    %110 = vector.broadcast %109 : vector<1x1xf32> to vector<8x1xf32>
    %111 = arith.mulf %106, %110 : vector<8x1xf32>
    %112 = vector.broadcast %111 : vector<8x1xf32> to vector<8x128xf32>
    %113 = arith.mulf %112, %95 : vector<8x128xf32>
    %cst_54 = arith.constant dense<0.000000e+00> : vector<128xf32>
    %114 = vector.multi_reduction <add>, %113, %cst_54 [0] : vector<8x128xf32> to vector<128xf32>
    %115 = vector.shape_cast %114 : vector<128xf32> to vector<1x128xf32>
    %116 = vector.shape_cast %115 : vector<1x128xf32> to vector<1x1x128xf32>
    %c0_55 = arith.constant 0 : index
    %c3 = arith.constant 3 : index
    %c0_56 = arith.constant 0 : index
    %117 = vector.load %arg7[%c0_55, %c3, %c0_56] : memref<1x4x128xf32, #tpu.memory_space<vmem>>, vector<1x1x128xf32>
    tpu.vector_store %arg7[%c0_55, %c3, %c0_56], %116 {strides = array<i32>} : memref<1x4x128xf32, #tpu.memory_space<vmem>>, vector<1x1x128xf32>,
    return
  }
  func.func @transform_0(%arg0: i32) -> (i32, i32) {
    %c0_i32 = arith.constant 0 : i32
    %c0_i32_0 = arith.constant 0 : i32
    %c0_i32_1 = arith.constant 0 : i32
    return %c0_i32, %c0_i32_0 : i32, i32
  }
  func.func @transform_1(%arg0: i32) -> (i32, i32, i32) {
    %c0_i32 = arith.constant 0 : i32
    %c0_i32_0 = arith.constant 0 : i32
    %c0_i32_1 = arith.constant 0 : i32
    return %arg0, %c0_i32, %c0_i32_0 : i32, i32, i32
  }
  func.func @transform_2(%arg0: i32) -> (i32, i32, i32) {
    %c0_i32 = arith.constant 0 : i32
    %c0_i32_0 = arith.constant 0 : i32
    %c0_i32_1 = arith.constant 0 : i32
    return %arg0, %c0_i32, %c0_i32_0 : i32, i32, i32
  }
  func.func @transform_3(%arg0: i32) -> (i32, i32, i32) {
    %c0_i32 = arith.constant 0 : i32
    %c0_i32_0 = arith.constant 0 : i32
    %c0_i32_1 = arith.constant 0 : i32
    return %arg0, %c0_i32, %c0_i32_0 : i32, i32, i32
  }
  func.func @transform_4(%arg0: i32) -> (i32, i32, i32) {
    %c0_i32 = arith.constant 0 : i32
    %c0_i32_0 = arith.constant 0 : i32
    %c0_i32_1 = arith.constant 0 : i32
    return %arg0, %c0_i32, %c0_i32_0 : i32, i32, i32
  }
  func.func @transform_5(%arg0: i32) -> (i32, i32, i32) {
    %c0_i32 = arith.constant 0 : i32
    %c0_i32_0 = arith.constant 0 : i32
    %c0_i32_1 = arith.constant 0 : i32
    return %arg0, %c0_i32, %c0_i32_0 : i32, i32, i32
  }
  func.func @transform_6(%arg0: i32) -> (i32, i32, i32) {
    %c0_i32 = arith.constant 0 : i32
    %c0_i32_0 = arith.constant 0 : i32
    %c0_i32_1 = arith.constant 0 : i32
    return %arg0, %c0_i32, %c0_i32_0 : i32, i32, i32
  }
}

</mosaic_0001>

<llo_original>
// kernel: tpu_custom_call.1
$region0: #{tpu_custom_call.1}
  #allocation0 [shape = 'u32[]', space=smem, size = 0x4, offset = 0x4, fixed_abs, tag = 'smem constant byte address 0x4 - core index']
  #allocation1 [shape = 'u32[144,128]{1,0:T(1,128)}', space=vmem, size = 0x12000, scoped, tag = 'internal scratch']
  #allocation2 [shape = 'f32[8,1024]{1,0:T(8,128)}', space=vmem, size = 0x8000, scoped, tag = 'scratch operand']
  %s0 = inlined_call_operand.hbm [shape: bf16[8,128], index: 0, kind: input, shape index: {}]
  %s1 = inlined_call_operand.hbm [shape: bf16[2,4,128], index: 1, kind: input, shape index: {}]
  %s2 = inlined_call_operand.hbm [shape: bf16[2,128,512], index: 2, kind: input, shape index: {}]
  %s3 = inlined_call_operand.hbm [shape: bf16[2,128,1024], index: 3, kind: input, shape index: {}]
  %s4 = inlined_call_operand.hbm [shape: f32[2,1,512], index: 4, kind: input, shape index: {}]
  %s5 = inlined_call_operand.vmem [shape: f32[2,1,1024], index: 5, kind: input, shape index: {}]
  %s6 = inlined_call_operand.hbm [shape: f32[2,4,128], index: 6, kind: output, shape index: {}]
  %s7 = sld [smem:[#allocation0]]
  $region77: #{tpu_custom_call.1} parent=0
    _
  %s9 = ssub.s32 1, %s7
  %s10 = scalar_select 0, %s9, %s7
  $region1: #{tpu_custom_call.1} parent=0
    #allocation3 [shape = 'u8[2048]{0}', space=vmem, size = 0x800, scoped, tag = 'input window, operand 0, single buffered']
    #allocation4 [shape = 's32[2]{0}', space=sflag, size = 0x8, scoped, tag = 'scoped memory for tpu_custom_call.1']
    #allocation5 [shape = 's32[2]{0}', space=sflag, size = 0x8, scoped, tag = 'scoped memory for tpu_custom_call.1']
    #allocation6 [shape = 'u8[2048]{0}', space=vmem, size = 0x800, scoped, tag = 'input window, operand 1']
    #allocation7 [shape = 's32[2]{0}', space=sflag, size = 0x8, scoped, tag = 'scoped memory for tpu_custom_call.1']
    #allocation8 [shape = 'u8[262144]{0}', space=vmem, size = 0x40000, scoped, tag = 'input window, operand 2']
    #allocation9 [shape = 'u8[524288]{0}', space=vmem, size = 0x80000, scoped, tag = 'input window, operand 3']
    #allocation10 [shape = 's32[2]{0}', space=sflag, size = 0x8, scoped, tag = 'scoped memory for tpu_custom_call.1']
    #allocation11 [shape = 'u8[4096]{0}', space=vmem, size = 0x1000, scoped, tag = 'input window, operand 4']
    #allocation12 [shape = 'u8[4096]{0}', space=vmem, size = 0x1000, scoped, tag = 'output window, operand 0']
    %11 = vsyncpa [#allocation4], 0
    %12 = vsyncpa [#allocation7], 0
    %s13 = scalar_lea.sflag [#allocation7], 1
    %14 = vsyncpa %s13, 0
    %15 = vsyncpa [#allocation10], 0
    %s16 = scalar_lea.sflag [#allocation10], 1
    %17 = vsyncpa %s16, 0
    %18 = vsyncpa [#allocation5], 0
    %s19 = scalar_lea.sflag [#allocation5], 1
    %20 = vsyncpa %s19, 0
    loop: start=0, step=1, limit=4
    $region2: #{tpu_custom_call.1} parent=1 // loop_pre_header
      _
    $region3: #{tpu_custom_call.1} parent=1 // loop_header
      %s22 = sphi 0, %s26
      %p23 = scmp.ge.s32.totalorder %s22, 4
      %s30 = sphi 0, %s30
      %s32 = sphi 0, %s30
      %s33 = sphi 0, %s32
      %s47 = sphi 0, %s33
      %s53 = sphi 0, %s55
      %s56 = sphi 0, %s53
      %s57 = sphi 0, %s56
      %s73 = sphi 0, %s57
      %s79 = sphi 0, %s81
      %s82 = sphi 0, %s79
      %s83 = sphi 0, %s82
      %s99 = sphi 0, %s83
      %s105 = sphi 0, %s107
      %s108 = sphi 0, %s105
      %s109 = sphi 0, %s108
      %s125 = sphi 0, %s109
      %s131 = sphi 0, %s133
      %s134 = sphi 0, %s131
      %s135 = sphi 0, %s134
      %s151 = sphi 0, %s135
      %s157 = sphi 0, %s159
      %s160 = sphi 0, %s157
      %s161 = sphi 0, %s160
      %s177 = sphi 0, %s161
      %s183 = sphi 0, %s185
      %s186 = sphi 0, %s183
      %s187 = sphi 0, %s186
      %s203 = sphi 0, %s187
    $region4: #{tpu_custom_call.1} parent=1 // loop_header_branch
      %25 = sbr.rel (%p23) target = $region8
    $region5: #{tpu_custom_call.1} parent=1 // loop_body
      %s27 = ssub.s32 %s22, 1
      %s28 = ssub.s32 %s22, 2
      %s29 = sadd.s32 %s22, 1
      %s31 = sadd.s32 %s30, 1
      %p34 = scmp.eq.s32.totalorder %s22, 1
      %p35 = scmp.ne.s32.totalorder %s30, %s32
      %p36 = scmp.eq.s32.totalorder %s22, 0
      %p37 = por %p35, %p36
      %p38 = scmp.ne.s32.totalorder %s30, %s32
      %p39 = scmp.eq.s32.totalorder %s27, 1
      %p40 = por %p38, %p39
      %p41 = scmp.ne.s32.totalorder %s32, %s33
      %p42 = scmp.eq.s32.totalorder %s27, 0
      %p43 = por %p41, %p42
      %p44 = scmp.ne.s32.totalorder %s32, %s33
      %p45 = scmp.eq.s32.totalorder %s28, 1
      %p46 = por %p44, %p45
      %p48 = scmp.ne.s32.totalorder %s33, %s47
      %p49 = scmp.eq.s32.totalorder %s28, 0
      %p50 = por %p48, %p49
      %s51 = ssub.s32 %s22, %s29
      %p52 = scmp.eq.s32.totalorder %s51, 0
      %s54 = sadd.s32 %s53, 1
      %s55 = scalar_select %p52, %s53, %s54
      %p58 = pneg %p52
      %p59 = scmp.eq.s32.totalorder %s22, 1
      %p60 = por %p58, %p59
      %p61 = scmp.ne.s32.totalorder %s53, %s56
      %p62 = scmp.eq.s32.totalorder %s22, 0
      %p63 = por %p61, %p62
      %p64 = scmp.ne.s32.totalorder %s53, %s56
      %p65 = scmp.eq.s32.totalorder %s27, 1
      %p66 = por %p64, %p65
      %p67 = scmp.ne.s32.totalorder %s56, %s57
      %p68 = scmp.eq.s32.totalorder %s27, 0
      %p69 = por %p67, %p68
      %p70 = scmp.ne.s32.totalorder %s56, %s57
      %p71 = scmp.eq.s32.totalorder %s28, 1
      %p72 = por %p70, %p71
      %p74 = scmp.ne.s32.totalorder %s57, %s73
      %p75 = scmp.eq.s32.totalorder %s28, 0
      %p76 = por %p74, %p75
      %s77 = ssub.s32 %s22, %s29
      %p78 = scmp.eq.s32.totalorder %s77, 0
      %s80 = sadd.s32 %s79, 1
      %s81 = scalar_select %p78, %s79, %s80
      %p84 = pneg %p78
      %p85 = scmp.eq.s32.totalorder %s22, 1
      %p86 = por %p84, %p85
      %p87 = scmp.ne.s32.totalorder %s79, %s82
      %p88 = scmp.eq.s32.totalorder %s22, 0
      %p89 = por %p87, %p88
      %p90 = scmp.ne.s32.totalorder %s79, %s82
      %p91 = scmp.eq.s32.totalorder %s27, 1
      %p92 = por %p90, %p91
      %p93 = scmp.ne.s32.totalorder %s82, %s83
      %p94 = scmp.eq.s32.totalorder %s27, 0
      %p95 = por %p93, %p94
      %p96 = scmp.ne.s32.totalorder %s82, %s83
      %p97 = scmp.eq.s32.totalorder %s28, 1
      %p98 = por %p96, %p97
      %p100 = scmp.ne.s32.totalorder %s83, %s99
      %p101 = scmp.eq.s32.totalorder %s28, 0
      %p102 = por %p100, %p101
      %s103 = ssub.s32 %s22, %s29
      %p104 = scmp.eq.s32.totalorder %s103, 0
      %s106 = sadd.s32 %s105, 1
      %s107 = scalar_select %p104, %s105, %s106
      %p110 = pneg %p104
      %p111 = scmp.eq.s32.totalorder %s22, 1
      %p112 = por %p110, %p111
      %p113 = scmp.ne.s32.totalorder %s105, %s108
      %p114 = scmp.eq.s32.totalorder %s22, 0
      %p115 = por %p113, %p114
      %p116 = scmp.ne.s32.totalorder %s105, %s108
      %p117 = scmp.eq.s32.totalorder %s27, 1
      %p118 = por %p116, %p117
      %p119 = scmp.ne.s32.totalorder %s108, %s109
      %p120 = scmp.eq.s32.totalorder %s27, 0
      %p121 = por %p119, %p120
      %p122 = scmp.ne.s32.totalorder %s108, %s109
      %p123 = scmp.eq.s32.totalorder %s28, 1
      %p124 = por %p122, %p123
      %p126 = scmp.ne.s32.totalorder %s109, %s125
      %p127 = scmp.eq.s32.totalorder %s28, 0
      %p128 = por %p126, %p127
      %s129 = ssub.s32 %s22, %s29
      %p130 = scmp.eq.s32.totalorder %s129, 0
      %s132 = sadd.s32 %s131, 1
      %s133 = scalar_select %p130, %s131, %s132
      %p136 = pneg %p130
      %p137 = scmp.eq.s32.totalorder %s22, 1
      %p138 = por %p136, %p137
      %p139 = scmp.ne.s32.totalorder %s131, %s134
      %p140 = scmp.eq.s32.totalorder %s22, 0
      %p141 = por %p139, %p140
      %p142 = scmp.ne.s32.totalorder %s131, %s134
      %p143 = scmp.eq.s32.totalorder %s27, 1
      %p144 = por %p142, %p143
      %p145 = scmp.ne.s32.totalorder %s134, %s135
      %p146 = scmp.eq.s32.totalorder %s27, 0
      %p147 = por %p145, %p146
      %p148 = scmp.ne.s32.totalorder %s134, %s135
      %p149 = scmp.eq.s32.totalorder %s28, 1
      %p150 = por %p148, %p149
      %p152 = scmp.ne.s32.totalorder %s135, %s151
      %p153 = scmp.eq.s32.totalorder %s28, 0
      %p154 = por %p152, %p153
      %s155 = ssub.s32 %s22, %s29
      %p156 = scmp.eq.s32.totalorder %s155, 0
      %s158 = sadd.s32 %s157, 1
      %s159 = scalar_select %p156, %s157, %s158
      %p162 = pneg %p156
      %p163 = scmp.eq.s32.totalorder %s22, 1
      %p164 = por %p162, %p163
      %p165 = scmp.ne.s32.totalorder %s157, %s160
      %p166 = scmp.eq.s32.totalorder %s22, 0
      %p167 = por %p165, %p166
      %p168 = scmp.ne.s32.totalorder %s157, %s160
      %p169 = scmp.eq.s32.totalorder %s27, 1
      %p170 = por %p168, %p169
      %p171 = scmp.ne.s32.totalorder %s160, %s161
      %p172 = scmp.eq.s32.totalorder %s27, 0
      %p173 = por %p171, %p172
      %p174 = scmp.ne.s32.totalorder %s160, %s161
      %p175 = scmp.eq.s32.totalorder %s28, 1
      %p176 = por %p174, %p175
      %p178 = scmp.ne.s32.totalorder %s161, %s177
      %p179 = scmp.eq.s32.totalorder %s28, 0
      %p180 = por %p178, %p179
      %s181 = ssub.s32 %s22, %s29
      %p182 = scmp.eq.s32.totalorder %s181, 0
      %s184 = sadd.s32 %s183, 1
      %s185 = scalar_select %p182, %s183, %s184
      %p188 = pneg %p182
      %p189 = scmp.eq.s32.totalorder %s22, 1
      %p190 = por %p188, %p189
      %p191 = scmp.ne.s32.totalorder %s183, %s186
      %p192 = scmp.eq.s32.totalorder %s22, 0
      %p193 = por %p191, %p192
      %p194 = scmp.ne.s32.totalorder %s183, %s186
      %p195 = scmp.eq.s32.totalorder %s27, 1
      %p196 = por %p194, %p195
      %p197 = scmp.ne.s32.totalorder %s186, %s187
      %p198 = scmp.eq.s32.totalorder %s27, 0
      %p199 = por %p197, %p198
      %p200 = scmp.ne.s32.totalorder %s186, %s187
      %p201 = scmp.eq.s32.totalorder %s28, 1
      %p202 = por %p200, %p201
      %p204 = scmp.ne.s32.totalorder %s187, %s203
      %p205 = scmp.eq.s32.totalorder %s28, 0
      %p206 = por %p204, %p205
      %p207 = scmp.le.s32.totalorder 1, %s22
      %p208 = scmp.lt.s32.totalorder %s22, 3
      %p209 = pnand %p207, %p208
      %p210 = pneg %p209
      // Predicated region
      $region9: #{tpu_custom_call.1} parent=5 // pred_check
        _
      $region10: #{tpu_custom_call.1} parent=5 // pred_check_branch
        %212 = sbr.rel (%p209) target = $region12
      $region11: #{tpu_custom_call.1} parent=5 // pred_region
        %s213 = ssub.s32 %s22, 1
        // Predicated region
        $region13: #{tpu_custom_call.1} parent=11 // pred_check
          %p214 = pneg %p43
        $region14: #{tpu_custom_call.1} parent=11 // pred_check_branch
          %216 = sbr.rel (%p214) target = $region16
        $region15: #{tpu_custom_call.1} parent=11 // pred_region
          %s218 = ssub.s32 64, 64
          %219 = vsyncadd [#allocation4], %s218
          %s221 = sshll.u32 [#allocation3], 4
          %s222 = int_to_ptr.vmem [resolvable:$true] %s221
          %224 = dma.hbm_to_vmem [thread:$0]  %s0, 64, %s222, [#allocation4]
        $region16: #{tpu_custom_call.1} parent=11 // pred_fallthru
          _
      $region12: #{tpu_custom_call.1} parent=5 // pred_fallthru
        _
      %p225 = scmp.lt.s32.totalorder %s22, 2
      // Predicated region
      $region17: #{tpu_custom_call.1} parent=5 // pred_check
        %p226 = pneg %p225
      $region18: #{tpu_custom_call.1} parent=5 // pred_check_branch
        %228 = sbr.rel (%p226) target = $region20
      $region19: #{tpu_custom_call.1} parent=5 // pred_region
        // Predicated region
        $region21: #{tpu_custom_call.1} parent=19 // pred_check
          %p229 = pneg %p63
        $region22: #{tpu_custom_call.1} parent=19 // pred_check_branch
          %231 = sbr.rel (%p229) target = $region24
        $region23: #{tpu_custom_call.1} parent=19 // pred_region
          %s232 = sand.u32 %s22, 1
          %s233 = scalar_lea.sflag [#allocation7], %s232
          %s234 = sand.u32 %s53, 1
          %s235 = smul.addr %s234, 2
          %s236 = scalar_lea.vmem [#allocation6], %s235
          %s238 = ssub.s32 32, 32
          %239 = vsyncadd %s233, %s238
          %s240 = smul.addr %s22, 32
          %s241 = scalar_lea.hbm %s1, %s240
          %s243 = sshll.u32 %s236, 4
          %s244 = int_to_ptr.vmem [resolvable:$true] %s243
          %246 = dma.hbm_to_vmem [thread:$0]  %s241, 32, %s244, %s233
        $region24: #{tpu_custom_call.1} parent=19 // pred_fallthru
          _
        // Predicated region
        $region25: #{tpu_custom_call.1} parent=19 // pred_check
          %p247 = pneg %p89
        $region26: #{tpu_custom_call.1} parent=19 // pred_check_branch
          %249 = sbr.rel (%p247) target = $region28
        $region27: #{tpu_custom_call.1} parent=19 // pred_region
          %s250 = sand.u32 %s22, 1
          %s251 = scalar_lea.sflag [#allocation7], %s250
          %s252 = sand.u32 %s79, 1
          %s253 = smul.addr %s252, 256
          %s254 = scalar_lea.vmem [#allocation8], %s253
          %s256 = ssub.s32 4096, 4096
          %257 = vsyncadd %s251, %s256
          %s258 = smul.addr %s22, 64
          %s259 = smul.addr %s258, 64
          %s260 = scalar_lea.hbm %s2, %s259
          %s261 = sshll.u32 %s254, 4
          %s262 = int_to_ptr.vmem [resolvable:$true] %s261
          %267 = dma.hbm_to_vmem [thread:$0]  %s260, 4096, %s262, %s251, 256, 256, 16
        $region28: #{tpu_custom_call.1} parent=19 // pred_fallthru
          _
        // Predicated region
        $region29: #{tpu_custom_call.1} parent=19 // pred_check
          %p268 = pneg %p115
        $region30: #{tpu_custom_call.1} parent=19 // pred_check_branch
          %270 = sbr.rel (%p268) target = $region32
        $region31: #{tpu_custom_call.1} parent=19 // pred_region
          %s271 = sand.u32 %s22, 1
          %s272 = scalar_lea.sflag [#allocation10], %s271
          %s273 = sand.u32 %s105, 1
          %s274 = smul.addr %s273, 512
          %s275 = scalar_lea.vmem [#allocation9], %s274
          %s277 = ssub.s32 8192, 8192
          %278 = vsyncadd %s272, %s277
          %s279 = smul.addr %s22, 128
          %s280 = smul.addr %s279, 64
          %s281 = scalar_lea.hbm %s3, %s280
          %s282 = sshll.u32 %s275, 4
          %s283 = int_to_ptr.vmem [resolvable:$true] %s282
          %288 = dma.hbm_to_vmem [thread:$0]  %s281, 8192, %s283, %s272, 512, 512, 32
        $region32: #{tpu_custom_call.1} parent=19 // pred_fallthru
          _
        // Predicated region
        $region33: #{tpu_custom_call.1} parent=19 // pred_check
          %p289 = pneg %p141
        $region34: #{tpu_custom_call.1} parent=19 // pred_check_branch
          %291 = sbr.rel (%p289) target = $region36
        $region35: #{tpu_custom_call.1} parent=19 // pred_region
          %s292 = sand.u32 %s22, 1
          %s293 = scalar_lea.sflag [#allocation10], %s292
          %s294 = sand.u32 %s131, 1
          %s295 = smul.addr %s294, 4
          %s296 = scalar_lea.vmem [#allocation11], %s295
          %s298 = ssub.s32 64, 64
          %299 = vsyncadd %s293, %s298
          %s300 = smul.addr %s22, 4
          %s301 = smul.addr %s300, 16
          %s302 = scalar_lea.hbm %s4, %s301
          %s304 = sshll.u32 %s296, 4
          %s305 = int_to_ptr.vmem [resolvable:$true] %s304
          %307 = dma.hbm_to_vmem [thread:$0]  %s302, 64, %s305, %s293
        $region36: #{tpu_custom_call.1} parent=19 // pred_fallthru
          _
        // Predicated region
        $region37: #{tpu_custom_call.1} parent=19 // pred_check
          %p308 = pneg %p167
        $region38: #{tpu_custom_call.1} parent=19 // pred_check_branch
          %310 = sbr.rel (%p308) target = $region40
        $region39: #{tpu_custom_call.1} parent=19 // pred_region
          %p311 = scmp.lt.s32.totalorder %s22, 1
          %s312 = scalar_select %p311, %s22, 1
          %s313 = smul.addr %s312, 8
          %s314 = scalar_lea.vmem %s5, %s313
        $region40: #{tpu_custom_call.1} parent=19 // pred_fallthru
          _
      $region20: #{tpu_custom_call.1} parent=5 // pred_fallthru
        _
      %p315 = scmp.le.s32.totalorder 1, %s22
      %p316 = scmp.lt.s32.totalorder %s22, 3
      %p317 = pnand %p315, %p316
      %p318 = pneg %p317
      // Predicated region
      $region41: #{tpu_custom_call.1} parent=5 // pred_check
        _
      $region42: #{tpu_custom_call.1} parent=5 // pred_check_branch
        %320 = sbr.rel (%p317) target = $region44
      $region43: #{tpu_custom_call.1} parent=5 // pred_region
        %s321 = ssub.s32 %s22, 1
        // Predicated region
        $region45: #{tpu_custom_call.1} parent=43 // pred_check
          %p322 = pneg %p43
        $region46: #{tpu_custom_call.1} parent=43 // pred_check_branch
          %324 = sbr.rel (%p322) target = $region48
        $region47: #{tpu_custom_call.1} parent=43 // pred_region
          %325 = dma.done [#allocation4], 64
        $region48: #{tpu_custom_call.1} parent=43 // pred_fallthru
          _
        %s326 = sand.u32 %s27, 1
        %s327 = scalar_lea.sflag [#allocation7], %s326
        %s328 = sand.u32 %s56, 1
        %s329 = smul.addr %s328, 2
        %s330 = scalar_lea.vmem [#allocation6], %s329
        // Predicated region
        $region49: #{tpu_custom_call.1} parent=43 // pred_check
          %p331 = pneg %p69
        $region50: #{tpu_custom_call.1} parent=43 // pred_check_branch
          %333 = sbr.rel (%p331) target = $region52
        $region51: #{tpu_custom_call.1} parent=43 // pred_region
          %334 = dma.done %s327, 32
        $region52: #{tpu_custom_call.1} parent=43 // pred_fallthru
          _
        %s335 = sand.u32 %s27, 1
        %s336 = scalar_lea.sflag [#allocation7], %s335
        %s337 = sand.u32 %s82, 1
        %s338 = smul.addr %s337, 256
        %s339 = scalar_lea.vmem [#allocation8], %s338
        // Predicated region
        $region53: #{tpu_custom_call.1} parent=43 // pred_check
          %p340 = pneg %p95
        $region54: #{tpu_custom_call.1} parent=43 // pred_check_branch
          %342 = sbr.rel (%p340) target = $region56
        $region55: #{tpu_custom_call.1} parent=43 // pred_region
          %343 = dma.done %s336, 4096
        $region56: #{tpu_custom_call.1} parent=43 // pred_fallthru
          _
        %s344 = sand.u32 %s27, 1
        %s345 = scalar_lea.sflag [#allocation10], %s344
        %s346 = sand.u32 %s108, 1
        %s347 = smul.addr %s346, 512
        %s348 = scalar_lea.vmem [#allocation9], %s347
        // Predicated region
        $region57: #{tpu_custom_call.1} parent=43 // pred_check
          %p349 = pneg %p121
        $region58: #{tpu_custom_call.1} parent=43 // pred_check_branch
          %351 = sbr.rel (%p349) target = $region60
        $region59: #{tpu_custom_call.1} parent=43 // pred_region
          %352 = dma.done %s345, 8192
        $region60: #{tpu_custom_call.1} parent=43 // pred_fallthru
          _
        %s353 = sand.u32 %s27, 1
        %s354 = scalar_lea.sflag [#allocation10], %s353
        %s355 = sand.u32 %s134, 1
        %s356 = smul.addr %s355, 4
        %s357 = scalar_lea.vmem [#allocation11], %s356
        // Predicated region
        $region61: #{tpu_custom_call.1} parent=43 // pred_check
          %p358 = pneg %p147
        $region62: #{tpu_custom_call.1} parent=43 // pred_check_branch
          %360 = sbr.rel (%p358) target = $region64
        $region63: #{tpu_custom_call.1} parent=43 // pred_region
          %361 = dma.done %s354, 64
        $region64: #{tpu_custom_call.1} parent=43 // pred_fallthru
          _
        %p362 = pneg %p43
        %p363 = pneg %p40
        %s364 = sand.u32 %s27, 1
        %s365 = scalar_lea.sflag [#allocation7], %s364
        %s366 = sand.u32 %s56, 1
        %s367 = smul.addr %s366, 2
        %s368 = scalar_lea.vmem [#allocation6], %s367
        %p369 = pneg %p69
        %p370 = pneg %p66
        %s371 = sand.u32 %s27, 1
        %s372 = scalar_lea.sflag [#allocation7], %s371
        %s373 = sand.u32 %s82, 1
        %s374 = smul.addr %s373, 256
        %s375 = scalar_lea.vmem [#allocation8], %s374
        %p376 = pneg %p95
        %p377 = pneg %p92
        %s378 = sand.u32 %s27, 1
        %s379 = scalar_lea.sflag [#allocation10], %s378
        %s380 = sand.u32 %s108, 1
        %s381 = smul.addr %s380, 512
        %s382 = scalar_lea.vmem [#allocation9], %s381
        %p383 = pneg %p121
        %p384 = pneg %p118
        %s385 = sand.u32 %s27, 1
        %s386 = scalar_lea.sflag [#allocation10], %s385
        %s387 = sand.u32 %s134, 1
        %s388 = smul.addr %s387, 4
        %s389 = scalar_lea.vmem [#allocation11], %s388
        %p390 = pneg %p147
        %p391 = pneg %p144
        %p392 = scmp.lt.s32.totalorder %s27, 1
        %s393 = scalar_select %p392, %s27, 1
        %s394 = smul.addr %s393, 8
        %s395 = scalar_lea.vmem %s5, %s394
        %p396 = pneg %p173
        %p397 = pneg %p170
        %p398 = pneg %p199
        %p399 = pneg %p196
        %s400 = sand.u32 %s186, 1
        %s401 = scalar_lea.sflag [#allocation5], %s400
        %s402 = sand.u32 %s186, 1
        %s403 = smul.addr %s402, 4
        %s404 = scalar_lea.vmem [#allocation12], %s403
        %p405 = scmp.lt.s32.totalorder %s27, 1
        %s406 = scalar_select %p405, %s27, 1
        %s407 = smul.addr %s406, 8
        %s408 = scalar_lea.vmem %s5, %s407
        %v410 = vld [vmem:[#allocation3] sm:$0xf]
        %v411 = vld [vmem:[%s330] sm:$0x3]
        %v412 = vld [vmem:[%s339] sm:$0xff]
        %v413 = vld [vmem:[%s339 + $0x8] sm:$0xff]
        %v414 = vld [vmem:[%s339 + $0x10] sm:$0xff]
        %v415 = vld [vmem:[%s339 + $0x18] sm:$0xff]
        %v416 = vld [vmem:[%s339 + $0x20] sm:$0xff]
        %v417 = vld [vmem:[%s339 + $0x28] sm:$0xff]
        %v418 = vld [vmem:[%s339 + $0x30] sm:$0xff]
        %v419 = vld [vmem:[%s339 + $0x38] sm:$0xff]
        %v420 = vld [vmem:[%s339 + $0x40] sm:$0xff]
        %v421 = vld [vmem:[%s339 + $0x48] sm:$0xff]
        %v422 = vld [vmem:[%s339 + $0x50] sm:$0xff]
        %v423 = vld [vmem:[%s339 + $0x58] sm:$0xff]
        %v424 = vld [vmem:[%s339 + $0x60] sm:$0xff]
        %v425 = vld [vmem:[%s339 + $0x68] sm:$0xff]
        %v426 = vld [vmem:[%s339 + $0x70] sm:$0xff]
        %v427 = vld [vmem:[%s339 + $0x78] sm:$0xff]
        %v428 = vld [vmem:[%s339 + $0x80] sm:$0xff]
        %v429 = vld [vmem:[%s339 + $0x88] sm:$0xff]
        %v430 = vld [vmem:[%s339 + $0x90] sm:$0xff]
        %v431 = vld [vmem:[%s339 + $0x98] sm:$0xff]
        %v432 = vld [vmem:[%s339 + $0xa0] sm:$0xff]
        %v433 = vld [vmem:[%s339 + $0xa8] sm:$0xff]
        %v434 = vld [vmem:[%s339 + $0xb0] sm:$0xff]
        %v435 = vld [vmem:[%s339 + $0xb8] sm:$0xff]
        %v436 = vld [vmem:[%s339 + $0xc0] sm:$0xff]
        %v437 = vld [vmem:[%s339 + $0xc8] sm:$0xff]
        %v438 = vld [vmem:[%s339 + $0xd0] sm:$0xff]
        %v439 = vld [vmem:[%s339 + $0xd8] sm:$0xff]
        %v440 = vld [vmem:[%s339 + $0xe0] sm:$0xff]
        %v441 = vld [vmem:[%s339 + $0xe8] sm:$0xff]
        %v442 = vld [vmem:[%s339 + $0xf0] sm:$0xff]
        %v443 = vld [vmem:[%s339 + $0xf8] sm:$0xff]
        %v444 = vld [vmem:[%s348] sm:$0xff]
        %v445 = vld [vmem:[%s348 + $0x8] sm:$0xff]
        %v446 = vld [vmem:[%s348 + $0x10] sm:$0xff]
        %v447 = vld [vmem:[%s348 + $0x18] sm:$0xff]
        %v448 = vld [vmem:[%s348 + $0x20] sm:$0xff]
        %v449 = vld [vmem:[%s348 + $0x28] sm:$0xff]
        %v450 = vld [vmem:[%s348 + $0x30] sm:$0xff]
        %v451 = vld [vmem:[%s348 + $0x38] sm:$0xff]
        %v452 = vld [vmem:[%s348 + $0x40] sm:$0xff]
        %v453 = vld [vmem:[%s348 + $0x48] sm:$0xff]
        %v454 = vld [vmem:[%s348 + $0x50] sm:$0xff]
        %v455 = vld [vmem:[%s348 + $0x58] sm:$0xff]
        %v456 = vld [vmem:[%s348 + $0x60] sm:$0xff]
        %v457 = vld [vmem:[%s348 + $0x68] sm:$0xff]
        %v458 = vld [vmem:[%s348 + $0x70] sm:$0xff]
        %v459 = vld [vmem:[%s348 + $0x78] sm:$0xff]
        %v460 = vld [vmem:[%s348 + $0x80] sm:$0xff]
        %v461 = vld [vmem:[%s348 + $0x88] sm:$0xff]
        %v462 = vld [vmem:[%s348 + $0x90] sm:$0xff]
        %v463 = vld [vmem:[%s348 + $0x98] sm:$0xff]
        %v464 = vld [vmem:[%s348 + $0xa0] sm:$0xff]
        %v465 = vld [vmem:[%s348 + $0xa8] sm:$0xff]
        %v466 = vld [vmem:[%s348 + $0xb0] sm:$0xff]
        %v467 = vld [vmem:[%s348 + $0xb8] sm:$0xff]
        %v468 = vld [vmem:[%s348 + $0xc0] sm:$0xff]
        %v469 = vld [vmem:[%s348 + $0xc8] sm:$0xff]
        %v470 = vld [vmem:[%s348 + $0xd0] sm:$0xff]
        %v471 = vld [vmem:[%s348 + $0xd8] sm:$0xff]
        %v472 = vld [vmem:[%s348 + $0xe0] sm:$0xff]
        %v473 = vld [vmem:[%s348 + $0xe8] sm:$0xff]
        %v474 = vld [vmem:[%s348 + $0xf0] sm:$0xff]
        %v475 = vld [vmem:[%s348 + $0xf8] sm:$0xff]
        %v476 = vld [vmem:[%s348 + $0x100] sm:$0xff]
        %v477 = vld [vmem:[%s348 + $0x108] sm:$0xff]
        %v478 = vld [vmem:[%s348 + $0x110] sm:$0xff]
        %v479 = vld [vmem:[%s348 + $0x118] sm:$0xff]
        %v480 = vld [vmem:[%s348 + $0x120] sm:$0xff]
        %v481 = vld [vmem:[%s348 + $0x128] sm:$0xff]
        %v482 = vld [vmem:[%s348 + $0x130] sm:$0xff]
        %v483 = vld [vmem:[%s348 + $0x138] sm:$0xff]
        %v484 = vld [vmem:[%s348 + $0x140] sm:$0xff]
        %v485 = vld [vmem:[%s348 + $0x148] sm:$0xff]
        %v486 = vld [vmem:[%s348 + $0x150] sm:$0xff]
        %v487 = vld [vmem:[%s348 + $0x158] sm:$0xff]
        %v488 = vld [vmem:[%s348 + $0x160] sm:$0xff]
        %v489 = vld [vmem:[%s348 + $0x168] sm:$0xff]
        %v490 = vld [vmem:[%s348 + $0x170] sm:$0xff]
        %v491 = vld [vmem:[%s348 + $0x178] sm:$0xff]
        %v492 = vld [vmem:[%s348 + $0x180] sm:$0xff]
        %v493 = vld [vmem:[%s348 + $0x188] sm:$0xff]
        %v494 = vld [vmem:[%s348 + $0x190] sm:$0xff]
        %v495 = vld [vmem:[%s348 + $0x198] sm:$0xff]
        %v496 = vld [vmem:[%s348 + $0x1a0] sm:$0xff]
        %v497 = vld [vmem:[%s348 + $0x1a8] sm:$0xff]
        %v498 = vld [vmem:[%s348 + $0x1b0] sm:$0xff]
        %v499 = vld [vmem:[%s348 + $0x1b8] sm:$0xff]
        %v500 = vld [vmem:[%s348 + $0x1c0] sm:$0xff]
        %v501 = vld [vmem:[%s348 + $0x1c8] sm:$0xff]
        %v502 = vld [vmem:[%s348 + $0x1d0] sm:$0xff]
        %v503 = vld [vmem:[%s348 + $0x1d8] sm:$0xff]
        %v504 = vld [vmem:[%s348 + $0x1e0] sm:$0xff]
        %v505 = vld [vmem:[%s348 + $0x1e8] sm:$0xff]
        %v506 = vld [vmem:[%s348 + $0x1f0] sm:$0xff]
        %v507 = vld [vmem:[%s348 + $0x1f8] sm:$0xff]
        %v508 = vld [vmem:[%s357] sm:$0xf]
        %v509 = vld [vmem:[%s408] sm:$0xff]
        %v511 = vlaneseq
        %v512 = vshrl.u32 %v511, 7
        %v513 = vsub.s32 0, %v512
        %v514 = vrot.slane %v509, %v513
        %v515 = vlaneseq
        %v516 = vshrl.u32 %v515, 7
        %v517 = vsub.s32 1, %v516
        %v518 = vrot.slane %v509, %v517
        %v519 = vlaneseq
        %v520 = vshrl.u32 %v519, 7
        %v521 = vsub.s32 2, %v520
        %v522 = vrot.slane %v509, %v521
        %v523 = vlaneseq
        %v524 = vshrl.u32 %v523, 7
        %v525 = vsub.s32 3, %v524
        %v526 = vrot.slane %v509, %v525
        %v527 = vlaneseq
        %v528 = vshrl.u32 %v527, 7
        %v529 = vsub.s32 4, %v528
        %v530 = vrot.slane %v509, %v529
        %v531 = vlaneseq
        %v532 = vshrl.u32 %v531, 7
        %v533 = vsub.s32 5, %v532
        %v534 = vrot.slane %v509, %v533
        %v535 = vlaneseq
        %v536 = vshrl.u32 %v535, 7
        %v537 = vsub.s32 6, %v536
        %v538 = vrot.slane %v509, %v537
        %v539 = vlaneseq
        %v540 = vshrl.u32 %v539, 7
        %v541 = vsub.s32 7, %v540
        %v542 = vrot.slane %v509, %v541
        %v615 = vunpack.c.l.b16 %v444
        %v616 = vunpack.c.h.b16 %v444
        %v617 = vunpack.c.l.b16 %v445
        %v618 = vunpack.c.h.b16 %v445
        %v619 = vunpack.c.l.b16 %v446
        %v620 = vunpack.c.h.b16 %v446
        %v621 = vunpack.c.l.b16 %v447
        %v622 = vunpack.c.h.b16 %v447
        %v623 = vunpack.c.l.b16 %v448
        %v624 = vunpack.c.h.b16 %v448
        %v625 = vunpack.c.l.b16 %v449
        %v626 = vunpack.c.h.b16 %v449
        %v627 = vunpack.c.l.b16 %v450
        %v628 = vunpack.c.h.b16 %v450
        %v629 = vunpack.c.l.b16 %v451
        %v630 = vunpack.c.h.b16 %v451
        %v631 = vunpack.c.l.b16 %v452
        %v632 = vunpack.c.h.b16 %v452
        %v633 = vunpack.c.l.b16 %v453
        %v634 = vunpack.c.h.b16 %v453
        %v635 = vunpack.c.l.b16 %v454
        %v636 = vunpack.c.h.b16 %v454
        %v637 = vunpack.c.l.b16 %v455
        %v638 = vunpack.c.h.b16 %v455
        %v639 = vunpack.c.l.b16 %v456
        %v640 = vunpack.c.h.b16 %v456
        %v641 = vunpack.c.l.b16 %v457
        %v642 = vunpack.c.h.b16 %v457
        %v643 = vunpack.c.l.b16 %v458
        %v644 = vunpack.c.h.b16 %v458
        %v645 = vunpack.c.l.b16 %v459
        %v646 = vunpack.c.h.b16 %v459
        %v647 = vunpack.c.l.b16 %v460
        %v648 = vunpack.c.h.b16 %v460
        %v649 = vunpack.c.l.b16 %v461
        %v650 = vunpack.c.h.b16 %v461
        %v651 = vunpack.c.l.b16 %v462
        %v652 = vunpack.c.h.b16 %v462
        %v653 = vunpack.c.l.b16 %v463
        %v654 = vunpack.c.h.b16 %v463
        %v655 = vunpack.c.l.b16 %v464
        %v656 = vunpack.c.h.b16 %v464
        %v657 = vunpack.c.l.b16 %v465
        %v658 = vunpack.c.h.b16 %v465
        %v659 = vunpack.c.l.b16 %v466
        %v660 = vunpack.c.h.b16 %v466
        %v661 = vunpack.c.l.b16 %v467
        %v662 = vunpack.c.h.b16 %v467
        %v663 = vunpack.c.l.b16 %v468
        %v664 = vunpack.c.h.b16 %v468
        %v665 = vunpack.c.l.b16 %v469
        %v666 = vunpack.c.h.b16 %v469
        %v667 = vunpack.c.l.b16 %v470
        %v668 = vunpack.c.h.b16 %v470
        %v669 = vunpack.c.l.b16 %v471
        %v670 = vunpack.c.h.b16 %v471
        %v671 = vunpack.c.l.b16 %v472
        %v672 = vunpack.c.h.b16 %v472
        %v673 = vunpack.c.l.b16 %v473
        %v674 = vunpack.c.h.b16 %v473
        %v675 = vunpack.c.l.b16 %v474
        %v676 = vunpack.c.h.b16 %v474
        %v677 = vunpack.c.l.b16 %v475
        %v678 = vunpack.c.h.b16 %v475
        %v679 = vunpack.c.l.b16 %v476
        %v680 = vunpack.c.h.b16 %v476
        %v681 = vunpack.c.l.b16 %v477
        %v682 = vunpack.c.h.b16 %v477
        %v683 = vunpack.c.l.b16 %v478
        %v684 = vunpack.c.h.b16 %v478
        %v685 = vunpack.c.l.b16 %v479
        %v686 = vunpack.c.h.b16 %v479
        %v687 = vunpack.c.l.b16 %v480
        %v688 = vunpack.c.h.b16 %v480
        %v689 = vunpack.c.l.b16 %v481
        %v690 = vunpack.c.h.b16 %v481
        %v691 = vunpack.c.l.b16 %v482
        %v692 = vunpack.c.h.b16 %v482
        %v693 = vunpack.c.l.b16 %v483
        %v694 = vunpack.c.h.b16 %v483
        %v695 = vunpack.c.l.b16 %v484
        %v696 = vunpack.c.h.b16 %v484
        %v697 = vunpack.c.l.b16 %v485
        %v698 = vunpack.c.h.b16 %v485
        %v699 = vunpack.c.l.b16 %v486
        %v700 = vunpack.c.h.b16 %v486
        %v701 = vunpack.c.l.b16 %v487
        %v702 = vunpack.c.h.b16 %v487
        %v703 = vunpack.c.l.b16 %v488
        %v704 = vunpack.c.h.b16 %v488
        %v705 = vunpack.c.l.b16 %v489
        %v706 = vunpack.c.h.b16 %v489
        %v707 = vunpack.c.l.b16 %v490
        %v708 = vunpack.c.h.b16 %v490
        %v709 = vunpack.c.l.b16 %v491
        %v710 = vunpack.c.h.b16 %v491
        %v711 = vunpack.c.l.b16 %v492
        %v712 = vunpack.c.h.b16 %v492
        %v713 = vunpack.c.l.b16 %v493
        %v714 = vunpack.c.h.b16 %v493
        %v715 = vunpack.c.l.b16 %v494
        %v716 = vunpack.c.h.b16 %v494
        %v717 = vunpack.c.l.b16 %v495
        %v718 = vunpack.c.h.b16 %v495
        %v719 = vunpack.c.l.b16 %v496
        %v720 = vunpack.c.h.b16 %v496
        %v721 = vunpack.c.l.b16 %v497
        %v722 = vunpack.c.h.b16 %v497
        %v723 = vunpack.c.l.b16 %v498
        %v724 = vunpack.c.h.b16 %v498
        %v725 = vunpack.c.l.b16 %v499
        %v726 = vunpack.c.h.b16 %v499
        %v727 = vunpack.c.l.b16 %v500
        %v728 = vunpack.c.h.b16 %v500
        %v729 = vunpack.c.l.b16 %v501
        %v730 = vunpack.c.h.b16 %v501
        %v731 = vunpack.c.l.b16 %v502
        %v732 = vunpack.c.h.b16 %v502
        %v733 = vunpack.c.l.b16 %v503
        %v734 = vunpack.c.h.b16 %v503
        %v735 = vunpack.c.l.b16 %v504
        %v736 = vunpack.c.h.b16 %v504
        %v737 = vunpack.c.l.b16 %v505
        %v738 = vunpack.c.h.b16 %v505
        %v739 = vunpack.c.l.b16 %v506
        %v740 = vunpack.c.h.b16 %v506
        %v741 = vunpack.c.l.b16 %v507
        %v742 = vunpack.c.h.b16 %v507
        %v743 = vpack.c.b16 %v623, %v615
        %v744 = vpack.c.b16 %v624, %v616
        %v745 = vpack.c.b16 %v625, %v617
        %v746 = vpack.c.b16 %v626, %v618
        %v747 = vpack.c.b16 %v627, %v619
        %v748 = vpack.c.b16 %v628, %v620
        %v749 = vpack.c.b16 %v629, %v621
        %v750 = vpack.c.b16 %v630, %v622
        %v751 = vpack.c.b16 %v639, %v631
        %v752 = vpack.c.b16 %v640, %v632
        %v753 = vpack.c.b16 %v641, %v633
        %v754 = vpack.c.b16 %v642, %v634
        %v755 = vpack.c.b16 %v643, %v635
        %v756 = vpack.c.b16 %v644, %v636
        %v757 = vpack.c.b16 %v645, %v637
        %v758 = vpack.c.b16 %v646, %v638
        %v759 = vpack.c.b16 %v655, %v647
        %v760 = vpack.c.b16 %v656, %v648
        %v761 = vpack.c.b16 %v657, %v649
        %v762 = vpack.c.b16 %v658, %v650
        %v763 = vpack.c.b16 %v659, %v651
        %v764 = vpack.c.b16 %v660, %v652
        %v765 = vpack.c.b16 %v661, %v653
        %v766 = vpack.c.b16 %v662, %v654
        %v767 = vpack.c.b16 %v671, %v663
        %v768 = vpack.c.b16 %v672, %v664
        %v769 = vpack.c.b16 %v673, %v665
        %v770 = vpack.c.b16 %v674, %v666
        %v771 = vpack.c.b16 %v675, %v667
        %v772 = vpack.c.b16 %v676, %v668
        %v773 = vpack.c.b16 %v677, %v669
        %v774 = vpack.c.b16 %v678, %v670
        %v775 = vpack.c.b16 %v687, %v679
        %v776 = vpack.c.b16 %v688, %v680
        %v777 = vpack.c.b16 %v689, %v681
        %v778 = vpack.c.b16 %v690, %v682
        %v779 = vpack.c.b16 %v691, %v683
        %v780 = vpack.c.b16 %v692, %v684
        %v781 = vpack.c.b16 %v693, %v685
        %v782 = vpack.c.b16 %v694, %v686
        %v783 = vpack.c.b16 %v703, %v695
        %v784 = vpack.c.b16 %v704, %v696
        %v785 = vpack.c.b16 %v705, %v697
        %v786 = vpack.c.b16 %v706, %v698
        %v787 = vpack.c.b16 %v707, %v699
        %v788 = vpack.c.b16 %v708, %v700
        %v789 = vpack.c.b16 %v709, %v701
        %v790 = vpack.c.b16 %v710, %v702
        %v791 = vpack.c.b16 %v719, %v711
        %v792 = vpack.c.b16 %v720, %v712
        %v793 = vpack.c.b16 %v721, %v713
        %v794 = vpack.c.b16 %v722, %v714
        %v795 = vpack.c.b16 %v723, %v715
        %v796 = vpack.c.b16 %v724, %v716
        %v797 = vpack.c.b16 %v725, %v717
        %v798 = vpack.c.b16 %v726, %v718
        %v799 = vpack.c.b16 %v735, %v727
        %v800 = vpack.c.b16 %v736, %v728
        %v801 = vpack.c.b16 %v737, %v729
        %v802 = vpack.c.b16 %v738, %v730
        %v803 = vpack.c.b16 %v739, %v731
        %v804 = vpack.c.b16 %v740, %v732
        %v805 = vpack.c.b16 %v741, %v733
        %v806 = vpack.c.b16 %v742, %v734
        %871 = vmatprep.subr.bf16.mxu0 %v744
        %872 = vmatpush1.bf16.msra.mxu0 %v743
        %873 = vmatprep.subr.bf16.mxu0 %v752
        %874 = vmatpush1.bf16.msra.mxu0 %v751
        %875 = vmatprep.subr.bf16.mxu0 %v760
        %876 = vmatpush1.bf16.msra.mxu0 %v759
        %877 = vmatprep.subr.bf16.mxu0 %v768
        %878 = vmatpush1.bf16.msra.mxu0 %v767
        %879 = vmatprep.subr.bf16.mxu0 %v776
        %880 = vmatpush1.bf16.msra.mxu0 %v775
        %881 = vmatprep.subr.bf16.mxu0 %v784
        %882 = vmatpush1.bf16.msra.mxu0 %v783
        %883 = vmatprep.subr.bf16.mxu0 %v792
        %884 = vmatpush1.bf16.msra.mxu0 %v791
        %885 = vmatprep.subr.bf16.mxu0 %v800
        %886 = vmatpush1.bf16.msra.mxu0 %v799
        %887 = vmatprep.subr.bf16.mxu0 0
        %888 = vmatpush1.bf16.msra.mxu0 0
        %889 = vmatprep.subr.bf16.mxu0 0
        %890 = vmatpush1.bf16.msra.mxu0 0
        %891 = vmatprep.subr.bf16.mxu0 0
        %892 = vmatpush1.bf16.msra.mxu0 0
        %893 = vmatprep.subr.bf16.mxu0 0
        %894 = vmatpush1.bf16.msra.mxu0 0
        %895 = vmatprep.subr.bf16.mxu0 0
        %896 = vmatpush1.bf16.msra.mxu0 0
        %897 = vmatprep.subr.bf16.mxu0 0
        %898 = vmatpush1.bf16.msra.mxu0 0
        %899 = vmatprep.subr.bf16.mxu0 0
        %900 = vmatpush1.bf16.msra.mxu0 0
        %901 = vmatprep.subr.bf16.mxu0 0
        %902 = vmatpush1.bf16.msra.mxu0 0
        %903 = vmatprep.mubr.bf16.mxu0 0
        %904 = vmatmul.mubr.bf16.gmra.mrb[0].mxu0 %v410
        %v905 = vpop.f32.mrb[0].mxu0
        %v906 = vadd.f32 %v514, %v905
        %v907 = vpop.f32.mrb[0].mxu0
        %v908 = vadd.f32 %v518, %v907
        %v909 = vpop.f32.mrb[0].mxu0
        %v910 = vpop.f32.mrb[0].mxu0
        %911 = vdwg.mxu0
        %912 = vmatprep.subr.bf16.mxu0 %v746
        %913 = vmatpush1.bf16.msra.mxu0 %v745
        %914 = vmatprep.subr.bf16.mxu0 %v754
        %915 = vmatpush1.bf16.msra.mxu0 %v753
        %916 = vmatprep.subr.bf16.mxu0 %v762
        %917 = vmatpush1.bf16.msra.mxu0 %v761
        %918 = vmatprep.subr.bf16.mxu0 %v770
        %919 = vmatpush1.bf16.msra.mxu0 %v769
        %920 = vmatprep.subr.bf16.mxu0 %v778
        %921 = vmatpush1.bf16.msra.mxu0 %v777
        %922 = vmatprep.subr.bf16.mxu0 %v786
        %923 = vmatpush1.bf16.msra.mxu0 %v785
        %924 = vmatprep.subr.bf16.mxu0 %v794
        %925 = vmatpush1.bf16.msra.mxu0 %v793
        %926 = vmatprep.subr.bf16.mxu0 %v802
        %927 = vmatpush1.bf16.msra.mxu0 %v801
        %928 = vmatprep.subr.bf16.mxu0 0
        %929 = vmatpush1.bf16.msra.mxu0 0
        %930 = vmatprep.subr.bf16.mxu0 0
        %931 = vmatpush1.bf16.msra.mxu0 0
        %932 = vmatprep.subr.bf16.mxu0 0
        %933 = vmatpush1.bf16.msra.mxu0 0
        %934 = vmatprep.subr.bf16.mxu0 0
        %935 = vmatpush1.bf16.msra.mxu0 0
        %936 = vmatprep.subr.bf16.mxu0 0
        %937 = vmatpush1.bf16.msra.mxu0 0
        %938 = vmatprep.subr.bf16.mxu0 0
        %939 = vmatpush1.bf16.msra.mxu0 0
        %940 = vmatprep.subr.bf16.mxu0 0
        %941 = vmatpush1.bf16.msra.mxu0 0
        %942 = vmatprep.subr.bf16.mxu0 0
        %943 = vmatpush1.bf16.msra.mxu0 0
        %944 = vmatprep.mubr.bf16.mxu0 0
        %945 = vmatmul.mubr.bf16.gmra.mrb[0].mxu0 %v410
        %v946 = vpop.f32.mrb[0].mxu0
        %v947 = vadd.f32 %v522, %v946
        %v948 = vpop.f32.mrb[0].mxu0
        %v949 = vadd.f32 %v526, %v948
        %v950 = vpop.f32.mrb[0].mxu0
        %v951 = vpop.f32.mrb[0].mxu0
        %952 = vdwg.mxu0
        %953 = vmatprep.subr.bf16.mxu0 %v748
        %954 = vmatpush1.bf16.msra.mxu0 %v747
        %955 = vmatprep.subr.bf16.mxu0 %v756
        %956 = vmatpush1.bf16.msra.mxu0 %v755
        %957 = vmatprep.subr.bf16.mxu0 %v764
        %958 = vmatpush1.bf16.msra.mxu0 %v763
        %959 = vmatprep.subr.bf16.mxu0 %v772
        %960 = vmatpush1.bf16.msra.mxu0 %v771
        %961 = vmatprep.subr.bf16.mxu0 %v780
        %962 = vmatpush1.bf16.msra.mxu0 %v779
        %963 = vmatprep.subr.bf16.mxu0 %v788
        %964 = vmatpush1.bf16.msra.mxu0 %v787
        %965 = vmatprep.subr.bf16.mxu0 %v796
        %966 = vmatpush1.bf16.msra.mxu0 %v795
        %967 = vmatprep.subr.bf16.mxu0 %v804
        %968 = vmatpush1.bf16.msra.mxu0 %v803
        %969 = vmatprep.subr.bf16.mxu0 0
        %970 = vmatpush1.bf16.msra.mxu0 0
        %971 = vmatprep.subr.bf16.mxu0 0
        %972 = vmatpush1.bf16.msra.mxu0 0
        %973 = vmatprep.subr.bf16.mxu0 0
        %974 = vmatpush1.bf16.msra.mxu0 0
        %975 = vmatprep.subr.bf16.mxu0 0
        %976 = vmatpush1.bf16.msra.mxu0 0
        %977 = vmatprep.subr.bf16.mxu0 0
        %978 = vmatpush1.bf16.msra.mxu0 0
        %979 = vmatprep.subr.bf16.mxu0 0
        %980 = vmatpush1.bf16.msra.mxu0 0
        %981 = vmatprep.subr.bf16.mxu0 0
        %982 = vmatpush1.bf16.msra.mxu0 0
        %983 = vmatprep.subr.bf16.mxu0 0
        %984 = vmatpush1.bf16.msra.mxu0 0
        %985 = vmatprep.mubr.bf16.mxu0 0
        %986 = vmatmul.mubr.bf16.gmra.mrb[0].mxu0 %v410
        %v987 = vpop.f32.mrb[0].mxu0
        %v988 = vadd.f32 %v530, %v987
        %v989 = vpop.f32.mrb[0].mxu0
        %v990 = vadd.f32 %v534, %v989
        %v991 = vpop.f32.mrb[0].mxu0
        %v992 = vpop.f32.mrb[0].mxu0
        %993 = vdwg.mxu0
        %994 = vmatprep.subr.bf16.mxu0 %v750
        %995 = vmatpush1.bf16.msra.mxu0 %v749
        %996 = vmatprep.subr.bf16.mxu0 %v758
        %997 = vmatpush1.bf16.msra.mxu0 %v757
        %998 = vmatprep.subr.bf16.mxu0 %v766
        %999 = vmatpush1.bf16.msra.mxu0 %v765
        %1000 = vmatprep.subr.bf16.mxu0 %v774
        %1001 = vmatpush1.bf16.msra.mxu0 %v773
        %1002 = vmatprep.subr.bf16.mxu0 %v782
        %1003 = vmatpush1.bf16.msra.mxu0 %v781
        %1004 = vmatprep.subr.bf16.mxu0 %v790
        %1005 = vmatpush1.bf16.msra.mxu0 %v789
        %1006 = vmatprep.subr.bf16.mxu0 %v798
        %1007 = vmatpush1.bf16.msra.mxu0 %v797
        %1008 = vmatprep.subr.bf16.mxu0 %v806
        %1009 = vmatpush1.bf16.msra.mxu0 %v805
        %1010 = vmatprep.subr.bf16.mxu0 0
        %1011 = vmatpush1.bf16.msra.mxu0 0
        %1012 = vmatprep.subr.bf16.mxu0 0
        %1013 = vmatpush1.bf16.msra.mxu0 0
        %1014 = vmatprep.subr.bf16.mxu0 0
        %1015 = vmatpush1.bf16.msra.mxu0 0
        %1016 = vmatprep.subr.bf16.mxu0 0
        %1017 = vmatpush1.bf16.msra.mxu0 0
        %1018 = vmatprep.subr.bf16.mxu0 0
        %1019 = vmatpush1.bf16.msra.mxu0 0
        %1020 = vmatprep.subr.bf16.mxu0 0
        %1021 = vmatpush1.bf16.msra.mxu0 0
        %1022 = vmatprep.subr.bf16.mxu0 0
        %1023 = vmatpush1.bf16.msra.mxu0 0
        %1024 = vmatprep.subr.bf16.mxu0 0
        %1025 = vmatpush1.bf16.msra.mxu0 0
        %1026 = vmatprep.mubr.bf16.mxu0 0
        %1027 = vmatmul.mubr.bf16.gmra.mrb[0].mxu0 %v410
        %v1028 = vpop.f32.mrb[0].mxu0
        %v1029 = vadd.f32 %v538, %v1028
        %v1030 = vpop.f32.mrb[0].mxu0
        %v1031 = vadd.f32 %v542, %v1030
        %v1032 = vpop.f32.mrb[0].mxu0
        %v1033 = vpop.f32.mrb[0].mxu0
        %1034 = vdwg.mxu0
        %1035 = vst [vmem:[#allocation2] sm:$0xff] %v906
        %1036 = vst [vmem:[#allocation2 + $0x8] sm:$0xff] %v908
        %1037 = vst [vmem:[#allocation2 + $0x10] sm:$0xff] %v947
        %1038 = vst [vmem:[#allocation2 + $0x18] sm:$0xff] %v949
        %1039 = vst [vmem:[#allocation2 + $0x20] sm:$0xff] %v988
        %1040 = vst [vmem:[#allocation2 + $0x28] sm:$0xff] %v990
        %1041 = vst [vmem:[#allocation2 + $0x30] sm:$0xff] %v1029
        %1042 = vst [vmem:[#allocation2 + $0x38] sm:$0xff] %v1031
        %v1044 = vlaneseq
        %v1045 = vshrl.u32 %v1044, 7
        %v1046 = vsub.s32 0, %v1045
        %v1047 = vrot.slane %v508, %v1046
        %v1048 = vlaneseq
        %v1049 = vshrl.u32 %v1048, 7
        %v1050 = vsub.s32 1, %v1049
        %v1051 = vrot.slane %v508, %v1050
        %v1052 = vlaneseq
        %v1053 = vshrl.u32 %v1052, 7
        %v1054 = vsub.s32 2, %v1053
        %v1055 = vrot.slane %v508, %v1054
        %v1056 = vlaneseq
        %v1057 = vshrl.u32 %v1056, 7
        %v1058 = vsub.s32 3, %v1057
        %v1059 = vrot.slane %v508, %v1058
        %v1096 = vunpack.c.l.b16 %v412
        %v1097 = vunpack.c.h.b16 %v412
        %v1098 = vunpack.c.l.b16 %v413
        %v1099 = vunpack.c.h.b16 %v413
        %v1100 = vunpack.c.l.b16 %v414
        %v1101 = vunpack.c.h.b16 %v414
        %v1102 = vunpack.c.l.b16 %v415
        %v1103 = vunpack.c.h.b16 %v415
        %v1104 = vunpack.c.l.b16 %v416
        %v1105 = vunpack.c.h.b16 %v416
        %v1106 = vunpack.c.l.b16 %v417
        %v1107 = vunpack.c.h.b16 %v417
        %v1108 = vunpack.c.l.b16 %v418
        %v1109 = vunpack.c.h.b16 %v418
        %v1110 = vunpack.c.l.b16 %v419
        %v1111 = vunpack.c.h.b16 %v419
        %v1112 = vunpack.c.l.b16 %v420
        %v1113 = vunpack.c.h.b16 %v420
        %v1114 = vunpack.c.l.b16 %v421
        %v1115 = vunpack.c.h.b16 %v421
        %v1116 = vunpack.c.l.b16 %v422
        %v1117 = vunpack.c.h.b16 %v422
        %v1118 = vunpack.c.l.b16 %v423
        %v1119 = vunpack.c.h.b16 %v423
        %v1120 = vunpack.c.l.b16 %v424
        %v1121 = vunpack.c.h.b16 %v424
        %v1122 = vunpack.c.l.b16 %v425
        %v1123 = vunpack.c.h.b16 %v425
        %v1124 = vunpack.c.l.b16 %v426
        %v1125 = vunpack.c.h.b16 %v426
        %v1126 = vunpack.c.l.b16 %v427
        %v1127 = vunpack.c.h.b16 %v427
        %v1128 = vunpack.c.l.b16 %v428
        %v1129 = vunpack.c.h.b16 %v428
        %v1130 = vunpack.c.l.b16 %v429
        %v1131 = vunpack.c.h.b16 %v429
        %v1132 = vunpack.c.l.b16 %v430
        %v1133 = vunpack.c.h.b16 %v430
        %v1134 = vunpack.c.l.b16 %v431
        %v1135 = vunpack.c.h.b16 %v431
        %v1136 = vunpack.c.l.b16 %v432
        %v1137 = vunpack.c.h.b16 %v432
        %v1138 = vunpack.c.l.b16 %v433
        %v1139 = vunpack.c.h.b16 %v433
        %v1140 = vunpack.c.l.b16 %v434
        %v1141 = vunpack.c.h.b16 %v434
        %v1142 = vunpack.c.l.b16 %v435
        %v1143 = vunpack.c.h.b16 %v435
        %v1144 = vunpack.c.l.b16 %v436
        %v1145 = vunpack.c.h.b16 %v436
        %v1146 = vunpack.c.l.b16 %v437
        %v1147 = vunpack.c.h.b16 %v437
        %v1148 = vunpack.c.l.b16 %v438
        %v1149 = vunpack.c.h.b16 %v438
        %v1150 = vunpack.c.l.b16 %v439
        %v1151 = vunpack.c.h.b16 %v439
        %v1152 = vunpack.c.l.b16 %v440
        %v1153 = vunpack.c.h.b16 %v440
        %v1154 = vunpack.c.l.b16 %v441
        %v1155 = vunpack.c.h.b16 %v441
        %v1156 = vunpack.c.l.b16 %v442
        %v1157 = vunpack.c.h.b16 %v442
        %v1158 = vunpack.c.l.b16 %v443
        %v1159 = vunpack.c.h.b16 %v443
        %v1160 = vpack.c.b16 %v1100, %v1096
        %v1161 = vpack.c.b16 %v1101, %v1097
        %v1162 = vpack.c.b16 %v1102, %v1098
        %v1163 = vpack.c.b16 %v1103, %v1099
        %v1164 = vpack.c.b16 %v1108, %v1104
        %v1165 = vpack.c.b16 %v1109, %v1105
        %v1166 = vpack.c.b16 %v1110, %v1106
        %v1167 = vpack.c.b16 %v1111, %v1107
        %v1168 = vpack.c.b16 %v1116, %v1112
        %v1169 = vpack.c.b16 %v1117, %v1113
        %v1170 = vpack.c.b16 %v1118, %v1114
        %v1171 = vpack.c.b16 %v1119, %v1115
        %v1172 = vpack.c.b16 %v1124, %v1120
        %v1173 = vpack.c.b16 %v1125, %v1121
        %v1174 = vpack.c.b16 %v1126, %v1122
        %v1175 = vpack.c.b16 %v1127, %v1123
        %v1176 = vpack.c.b16 %v1132, %v1128
        %v1177 = vpack.c.b16 %v1133, %v1129
        %v1178 = vpack.c.b16 %v1134, %v1130
        %v1179 = vpack.c.b16 %v1135, %v1131
        %v1180 = vpack.c.b16 %v1140, %v1136
        %v1181 = vpack.c.b16 %v1141, %v1137
        %v1182 = vpack.c.b16 %v1142, %v1138
        %v1183 = vpack.c.b16 %v1143, %v1139
        %v1184 = vpack.c.b16 %v1148, %v1144
        %v1185 = vpack.c.b16 %v1149, %v1145
        %v1186 = vpack.c.b16 %v1150, %v1146
        %v1187 = vpack.c.b16 %v1151, %v1147
        %v1188 = vpack.c.b16 %v1156, %v1152
        %v1189 = vpack.c.b16 %v1157, %v1153
        %v1190 = vpack.c.b16 %v1158, %v1154
        %v1191 = vpack.c.b16 %v1159, %v1155
        %1224 = vmatprep.subr.bf16.mxu0 %v1161
        %1225 = vmatpush1.bf16.msra.mxu0 %v1160
        %1226 = vmatprep.subr.bf16.mxu0 %v1165
        %1227 = vmatpush1.bf16.msra.mxu0 %v1164
        %1228 = vmatprep.subr.bf16.mxu0 %v1169
        %1229 = vmatpush1.bf16.msra.mxu0 %v1168
        %1230 = vmatprep.subr.bf16.mxu0 %v1173
        %1231 = vmatpush1.bf16.msra.mxu0 %v1172
        %1232 = vmatprep.subr.bf16.mxu0 %v1177
        %1233 = vmatpush1.bf16.msra.mxu0 %v1176
        %1234 = vmatprep.subr.bf16.mxu0 %v1181
        %1235 = vmatpush1.bf16.msra.mxu0 %v1180
        %1236 = vmatprep.subr.bf16.mxu0 %v1185
        %1237 = vmatpush1.bf16.msra.mxu0 %v1184
        %1238 = vmatprep.subr.bf16.mxu0 %v1189
        %1239 = vmatpush1.bf16.msra.mxu0 %v1188
        %1240 = vmatprep.subr.bf16.mxu0 0
        %1241 = vmatpush1.bf16.msra.mxu0 0
        %1242 = vmatprep.subr.bf16.mxu0 0
        %1243 = vmatpush1.bf16.msra.mxu0 0
        %1244 = vmatprep.subr.bf16.mxu0 0
        %1245 = vmatpush1.bf16.msra.mxu0 0
        %1246 = vmatprep.subr.bf16.mxu0 0
        %1247 = vmatpush1.bf16.msra.mxu0 0
        %1248 = vmatprep.subr.bf16.mxu0 0
        %1249 = vmatpush1.bf16.msra.mxu0 0
        %1250 = vmatprep.subr.bf16.mxu0 0
        %1251 = vmatpush1.bf16.msra.mxu0 0
        %1252 = vmatprep.subr.bf16.mxu0 0
        %1253 = vmatpush1.bf16.msra.mxu0 0
        %1254 = vmatprep.subr.bf16.mxu0 0
        %1255 = vmatpush1.bf16.msra.mxu0 0
        %1256 = vmatprep.mubr.bf16.mxu0 0
        %1257 = vmatmul.mubr.bf16.gmra.mrb[0].mxu0 %v411
        %v1258 = vpop.f32.mrb[0].mxu0
        %v1259 = vadd.f32 %v1047, %v1258
        %v1260 = vpop.f32.mrb[0].mxu0
        %v1261 = vadd.f32 %v1051, %v1260
        %v1262 = vpop.f32.mrb[0].mxu0
        %v1263 = vpop.f32.mrb[0].mxu0
        %1264 = vdwg.mxu0
        %1265 = vmatprep.subr.bf16.mxu0 %v1163
        %1266 = vmatpush1.bf16.msra.mxu0 %v1162
        %1267 = vmatprep.subr.bf16.mxu0 %v1167
        %1268 = vmatpush1.bf16.msra.mxu0 %v1166
        %1269 = vmatprep.subr.bf16.mxu0 %v1171
        %1270 = vmatpush1.bf16.msra.mxu0 %v1170
        %1271 = vmatprep.subr.bf16.mxu0 %v1175
        %1272 = vmatpush1.bf16.msra.mxu0 %v1174
        %1273 = vmatprep.subr.bf16.mxu0 %v1179
        %1274 = vmatpush1.bf16.msra.mxu0 %v1178
        %1275 = vmatprep.subr.bf16.mxu0 %v1183
        %1276 = vmatpush1.bf16.msra.mxu0 %v1182
        %1277 = vmatprep.subr.bf16.mxu0 %v1187
        %1278 = vmatpush1.bf16.msra.mxu0 %v1186
        %1279 = vmatprep.subr.bf16.mxu0 %v1191
        %1280 = vmatpush1.bf16.msra.mxu0 %v1190
        %1281 = vmatprep.subr.bf16.mxu0 0
        %1282 = vmatpush1.bf16.msra.mxu0 0
        %1283 = vmatprep.subr.bf16.mxu0 0
        %1284 = vmatpush1.bf16.msra.mxu0 0
        %1285 = vmatprep.subr.bf16.mxu0 0
        %1286 = vmatpush1.bf16.msra.mxu0 0
        %1287 = vmatprep.subr.bf16.mxu0 0
        %1288 = vmatpush1.bf16.msra.mxu0 0
        %1289 = vmatprep.subr.bf16.mxu0 0
        %1290 = vmatpush1.bf16.msra.mxu0 0
        %1291 = vmatprep.subr.bf16.mxu0 0
        %1292 = vmatpush1.bf16.msra.mxu0 0
        %1293 = vmatprep.subr.bf16.mxu0 0
        %1294 = vmatpush1.bf16.msra.mxu0 0
        %1295 = vmatprep.subr.bf16.mxu0 0
        %1296 = vmatpush1.bf16.msra.mxu0 0
        %1297 = vmatprep.mubr.bf16.mxu0 0
        %1298 = vmatmul.mubr.bf16.gmra.mrb[0].mxu0 %v411
        %v1299 = vpop.f32.mrb[0].mxu0
        %v1300 = vadd.f32 %v1055, %v1299
        %v1301 = vpop.f32.mrb[0].mxu0
        %v1302 = vadd.f32 %v1059, %v1301
        %v1303 = vpop.f32.mrb[0].mxu0
        %v1304 = vpop.f32.mrb[0].mxu0
        %1305 = vdwg.mxu0
        %v1306 = vld [vmem:[#allocation2] sm:$0xff]
        %v1307 = vld [vmem:[#allocation2 + $0x8] sm:$0xff]
        %v1308 = vlaneseq
        %v1309 = vshrl.u32 %v1308, 7
        %v1310 = vsub.s32 0, %v1309
        %v1311 = vrot.slane %v1259, %v1310
        %v1312 = vmul.f32 %v1311, %v1306
        %1313 = vadd.xlane.f32.xlu0 %v1312
        %v1314 = vpop.xlane.xlu0 %1313
        %v1315 = vmul.f32 %v1314, 0.088388346
        %v1316 = vrot.slane %v1315, 4
        %v1317 = vmax.f32 %v1315, %v1316
        %v1318 = vrot.slane %v1317, 2
        %v1319 = vmax.f32 %v1317, %v1318
        %v1320 = vrot.slane %v1319, 1
        %v1321 = vmax.f32 %v1319, %v1320
        %v1322 = vsub.f32 %v1315, %v1321
        %v1323 = vmul.f32 %v1322, 1.442695
        %v1324 = vpow.pop %v1323
        %v1325 = vrot.slane %v1324, 4
        %v1326 = vadd.f32 %v1324, %v1325
        %v1327 = vrot.slane %v1326, 2
        %v1328 = vadd.f32 %v1326, %v1327
        %v1329 = vrot.slane %v1328, 1
        %v1330 = vadd.f32 %v1328, %v1329
        %v1331 = vrcp.pop %v1330
        %v1332 = vmul.f32 %v1324, %v1331
        %v1333 = vmul.f32 %v1332, %v1307
        %v1334 = vrot.slane %v1333, 4
        %v1335 = vadd.f32 %v1333, %v1334
        %v1336 = vrot.slane %v1335, 2
        %v1337 = vadd.f32 %v1335, %v1336
        %v1338 = vrot.slane %v1337, 1
        %v1339 = vadd.f32 %v1337, %v1338
        %1340 = vst [vmem:[%s404] sm:$0x1] %v1339
        %v1341 = vld [vmem:[#allocation2 + $0x10] sm:$0xff]
        %v1342 = vld [vmem:[#allocation2 + $0x18] sm:$0xff]
        %v1343 = vlaneseq
        %v1344 = vshrl.u32 %v1343, 7
        %v1345 = vsub.s32 1, %v1344
        %v1346 = vrot.slane %v1261, %v1345
        %v1347 = vmul.f32 %v1346, %v1341
        %1348 = vadd.xlane.f32.xlu0 %v1347
        %v1349 = vpop.xlane.xlu0 %1348
        %v1350 = vmul.f32 %v1349, 0.088388346
        %v1351 = vrot.slane %v1350, 4
        %v1352 = vmax.f32 %v1350, %v1351
        %v1353 = vrot.slane %v1352, 2
        %v1354 = vmax.f32 %v1352, %v1353
        %v1355 = vrot.slane %v1354, 1
        %v1356 = vmax.f32 %v1354, %v1355
        %v1357 = vsub.f32 %v1350, %v1356
        %v1358 = vmul.f32 %v1357, 1.442695
        %v1359 = vpow.pop %v1358
        %v1360 = vrot.slane %v1359, 4
        %v1361 = vadd.f32 %v1359, %v1360
        %v1362 = vrot.slane %v1361, 2
        %v1363 = vadd.f32 %v1361, %v1362
        %v1364 = vrot.slane %v1363, 1
        %v1365 = vadd.f32 %v1363, %v1364
        %v1366 = vrcp.pop %v1365
        %v1367 = vmul.f32 %v1359, %v1366
        %v1368 = vmul.f32 %v1367, %v1342
        %v1369 = vrot.slane %v1368, 4
        %v1370 = vadd.f32 %v1368, %v1369
        %v1371 = vrot.slane %v1370, 2
        %v1372 = vadd.f32 %v1370, %v1371
        %v1373 = vrot.slane %v1372, 1
        %v1374 = vadd.f32 %v1372, %v1373
        %1375 = vst [vmem:[%s404 + $0x1] sm:$0x1] %v1374
        %v1376 = vld [vmem:[#allocation2 + $0x20] sm:$0xff]
        %v1377 = vld [vmem:[#allocation2 + $0x28] sm:$0xff]
        %v1378 = vlaneseq
        %v1379 = vshrl.u32 %v1378, 7
        %v1380 = vsub.s32 2, %v1379
        %v1381 = vrot.slane %v1300, %v1380
        %v1382 = vmul.f32 %v1381, %v1376
        %1383 = vadd.xlane.f32.xlu0 %v1382
        %v1384 = vpop.xlane.xlu0 %1383
        %v1385 = vmul.f32 %v1384, 0.088388346
        %v1386 = vrot.slane %v1385, 4
        %v1387 = vmax.f32 %v1385, %v1386
        %v1388 = vrot.slane %v1387, 2
        %v1389 = vmax.f32 %v1387, %v1388
        %v1390 = vrot.slane %v1389, 1
        %v1391 = vmax.f32 %v1389, %v1390
        %v1392 = vsub.f32 %v1385, %v1391
        %v1393 = vmul.f32 %v1392, 1.442695
        %v1394 = vpow.pop %v1393
        %v1395 = vrot.slane %v1394, 4
        %v1396 = vadd.f32 %v1394, %v1395
        %v1397 = vrot.slane %v1396, 2
        %v1398 = vadd.f32 %v1396, %v1397
        %v1399 = vrot.slane %v1398, 1
        %v1400 = vadd.f32 %v1398, %v1399
        %v1401 = vrcp.pop %v1400
        %v1402 = vmul.f32 %v1394, %v1401
        %v1403 = vmul.f32 %v1402, %v1377
        %v1404 = vrot.slane %v1403, 4
        %v1405 = vadd.f32 %v1403, %v1404
        %v1406 = vrot.slane %v1405, 2
        %v1407 = vadd.f32 %v1405, %v1406
        %v1408 = vrot.slane %v1407, 1
        %v1409 = vadd.f32 %v1407, %v1408
        %1410 = vst [vmem:[%s404 + $0x2] sm:$0x1] %v1409
        %v1411 = vld [vmem:[#allocation2 + $0x30] sm:$0xff]
        %v1412 = vld [vmem:[#allocation2 + $0x38] sm:$0xff]
        %v1413 = vlaneseq
        %v1414 = vshrl.u32 %v1413, 7
        %v1415 = vsub.s32 3, %v1414
        %v1416 = vrot.slane %v1302, %v1415
        %v1417 = vmul.f32 %v1416, %v1411
        %1418 = vadd.xlane.f32.xlu0 %v1417
        %v1419 = vpop.xlane.xlu0 %1418
        %v1420 = vmul.f32 %v1419, 0.088388346
        %v1421 = vrot.slane %v1420, 4
        %v1422 = vmax.f32 %v1420, %v1421
        %v1423 = vrot.slane %v1422, 2
        %v1424 = vmax.f32 %v1422, %v1423
        %v1425 = vrot.slane %v1424, 1
        %v1426 = vmax.f32 %v1424, %v1425
        %v1427 = vsub.f32 %v1420, %v1426
        %v1428 = vmul.f32 %v1427, 1.442695
        %v1429 = vpow.pop %v1428
        %v1430 = vrot.slane %v1429, 4
        %v1431 = vadd.f32 %v1429, %v1430
        %v1432 = vrot.slane %v1431, 2
        %v1433 = vadd.f32 %v1431, %v1432
        %v1434 = vrot.slane %v1433, 1
        %v1435 = vadd.f32 %v1433, %v1434
        %v1436 = vrcp.pop %v1435
        %v1437 = vmul.f32 %v1429, %v1436
        %v1438 = vmul.f32 %v1437, %v1412
        %v1439 = vrot.slane %v1438, 4
        %v1440 = vadd.f32 %v1438, %v1439
        %v1441 = vrot.slane %v1440, 2
        %v1442 = vadd.f32 %v1440, %v1441
        %v1443 = vrot.slane %v1442, 1
        %v1444 = vadd.f32 %v1442, %v1443
        %1445 = vst [vmem:[%s404 + $0x3] sm:$0x1] %v1444
        %s1446 = sand.u32 %s186, 1
        %s1447 = scalar_lea.sflag [#allocation5], %s1446
        %s1448 = sand.u32 %s186, 1
        %s1449 = smul.addr %s1448, 4
        %s1450 = scalar_lea.vmem [#allocation12], %s1449
        // Predicated region
        $region65: #{tpu_custom_call.1} parent=43 // pred_check
          %p1451 = pneg %p196
        $region66: #{tpu_custom_call.1} parent=43 // pred_check_branch
          %1453 = sbr.rel (%p1451) target = $region68
        $region67: #{tpu_custom_call.1} parent=43 // pred_region
          %s1455 = ssub.s32 64, 64
          %1456 = vsyncadd %s1447, %s1455
          %s1457 = smul.addr %s27, 64
          %s1458 = scalar_lea.hbm %s6, %s1457
          %s1460 = sshll.u32 %s1450, 4
          %s1461 = int_to_ptr.vmem [resolvable:$true] %s1460
          %1463 = dma.vmem_to_hbm [thread:$0]  %s1461, 64, %s1458, %s1447
        $region68: #{tpu_custom_call.1} parent=43 // pred_fallthru
          _
      $region44: #{tpu_custom_call.1} parent=5 // pred_fallthru
        _
      %p1464 = scmp.le.s32.totalorder 2, %s22
      // Predicated region
      $region69: #{tpu_custom_call.1} parent=5 // pred_check
        %p1465 = pneg %p1464
      $region70: #{tpu_custom_call.1} parent=5 // pred_check_branch
        %1467 = sbr.rel (%p1465) target = $region72
      $region71: #{tpu_custom_call.1} parent=5 // pred_region
        %s1468 = ssub.s32 %s22, 2
        // Predicated region
        $region73: #{tpu_custom_call.1} parent=71 // pred_check
          %p1469 = pneg %p202
        $region74: #{tpu_custom_call.1} parent=71 // pred_check_branch
          %1471 = sbr.rel (%p1469) target = $region76
        $region75: #{tpu_custom_call.1} parent=71 // pred_region
          %s1472 = sand.u32 %s187, 1
          %s1473 = scalar_lea.sflag [#allocation5], %s1472
          %s1474 = sand.u32 %s187, 1
          %s1475 = smul.addr %s1474, 4
          %s1476 = scalar_lea.vmem [#allocation12], %s1475
          %1477 = dma.done %s1473, 64
        $region76: #{tpu_custom_call.1} parent=71 // pred_fallthru
          _
      $region72: #{tpu_custom_call.1} parent=5 // pred_fallthru
        _
    $region6: #{tpu_custom_call.1} parent=1 // loop_footer
      %s26 = sadd.s32 1, %s22
    $region7: #{tpu_custom_call.1} parent=1 // loop_footer_branch
      %21 = sbr.rel target = $region3
    $region8: #{tpu_custom_call.1} parent=1 // loop_exit
      _
    %1478 = vsyncpa [#allocation4], 1
    %s1479 = scalar_lea.sflag [#allocation4], 1
    %1480 = vsyncpa %s1479, 1
    %1481 = vsyncpa [#allocation7], 1
    %s1482 = scalar_lea.sflag [#allocation7], 1
    %1483 = vsyncpa %s1482, 1
    %1484 = vsyncpa [#allocation10], 1
    %s1485 = scalar_lea.sflag [#allocation10], 1
    %1486 = vsyncpa %s1485, 1
    %1487 = vsyncpa [#allocation5], 1
    %s1488 = scalar_lea.sflag [#allocation5], 1
    %1489 = vsyncpa %s1488, 1

</llo_original>
